<compile_context>
chip_gen: v7x
topology: tpu7x:2x2x1
jax: 0.10.0
libtpu: 0.0.40
codegen_flags: <defaults>
</compile_context>

<pallas_src>
import functools

import jax
import jax.numpy as jnp
from jax.experimental import pallas as pl


def _mha_kernel(x_ref, params_ref, out_ref, attn_ref):
    # x_ref: (N, L, E) full block; params_ref: (E+1, 4E) packed slab.
    N, L, E = x_ref.shape            # num_heads == E  ->  head_dim == 1

    # ---- static views into the packed parameter slab (one DMA upstream) ---
    w_in = params_ref[0:E, 0:3 * E]           # (E, 3E) == in_proj_weight.T
    w_out = params_ref[0:E, 3 * E:4 * E]      # (E, E)  == out_proj.weight.T
    b_in = params_ref[E:E + 1, 0:3 * E]       # (1, 3E) == in_proj_bias
    b_out = params_ref[E:E + 1, 3 * E:4 * E]  # (1, E)  == out_proj.bias

    # ---- fused Q/K/V projection for all N sequences at once ---------------
    x2d = x_ref[...].reshape(N * L, E)        # leading-dim merge only (free)
    qkv = jnp.dot(x2d, w_in,
                  preferred_element_type=jnp.float32,
                  precision=jax.lax.Precision.HIGHEST) + b_in      # (N*L, 3E)
    q = qkv[:, 0 * E:1 * E].reshape(N, L, E)
    k = qkv[:, 1 * E:2 * E].reshape(N, L, E)
    v = qkv[:, 2 * E:3 * E].reshape(N, L, E)

    # head_dim == 1  ->  softmax scale == head_dim**-0.5 == 1.0 (as PyTorch)

    # ---- per-head scores in (N, Lq, Lk, H) layout: no transposes -----------
    scores = q[:, :, None, :] * k[:, None, :, :]          # (N, L, L, E)

    # softmax over the key axis (axis=2); reciprocal uses the EUP slot.
    m = jnp.max(scores, axis=2, keepdims=True)
    p = jnp.exp(scores - m)
    denom = jnp.sum(p, axis=2, keepdims=True)
    attn = p * pl.reciprocal(denom, approx=False)          # (N, L, L, E)

    # context: ctx[n, i, h] = sum_j attn[n, i, j, h] * v[n, j, h]
    ctx = jnp.sum(attn * v[:, None, :, :], axis=2)         # (N, L, E)

    # ---- fused output projection -------------------------------------------
    out = jnp.dot(ctx.reshape(N * L, E), w_out,
                  preferred_element_type=jnp.float32,
                  precision=jax.lax.Precision.HIGHEST) + b_out     # (N*L, E)

    out_ref[...] = out.reshape(N, L, E)
    # head-averaged attention weights (PyTorch average_attn_weights=True)
    attn_ref[...] = jnp.mean(attn, axis=-1)                # (N, L, L)


def pack_mha_params(in_proj_w, in_proj_b, out_proj_w, out_proj_b):
    """One-time (module-init) layout plumbing.

    Transposes the PyTorch-layout weights into matmul-friendly layout and
    concatenates all four parameters into a single f32 slab of shape
    (E+1, 4E) so the kernel sees exactly ONE parameter operand:
        rows 0..E-1, cols 0..3E-1 : in_proj_weight.T   (E, 3E)
        rows 0..E-1, cols 3E..4E-1: out_proj.weight.T  (E, E)
        row  E,      cols 0..3E-1 : in_proj_bias
        row  E,      cols 3E..4E-1: out_proj.bias
    Call once per parameter set; do NOT call per forward pass.
    """
    threeE, E = in_proj_w.shape
    assert threeE == 3 * E, in_proj_w.shape
    assert in_proj_b.shape == (3 * E,), in_proj_b.shape
    assert out_proj_w.shape == (E, E), out_proj_w.shape
    assert out_proj_b.shape == (E,), out_proj_b.shape
    w_rows = jnp.concatenate([in_proj_w.T, out_proj_w.T], axis=1)     # (E, 4E)
    b_row = jnp.concatenate([in_proj_b, out_proj_b])[None, :]         # (1, 4E)
    return jnp.concatenate([w_rows, b_row], axis=0).astype(jnp.float32)


@jax.jit
def agi_explainability_forward(x_stacked, packed_params):
    """Self-attention over a stack of sequences (one pallas_call, no grid).

    x_stacked     : (N, L, E) float32 — the `inputs` list stacked on axis 0.
    packed_params : (E+1, 4E) float32 — output of pack_mha_params().
    Returns (outputs (N, L, E), attention_weights (N, L, L)).
    """
    N, L, E = x_stacked.shape
    assert packed_params.shape == (E + 1, 4 * E), packed_params.shape

    # VMEM residency guard (perf review): the in-kernel working set is
    # dominated by the (N, L, L, E) scores/attn tensor.  v7x has only
    # 64 MiB physical / 32 MiB scoped VMEM (half of v5e/v6e), so re-tile over
    # (N, Lq) with a grid well before this trace-time bound trips.
    working_set_bytes = 4 * (N * L * L * E + 4 * N * L * E + (E + 1) * 4 * E)
    assert working_set_bytes < 16 * 1024 * 1024, (
        "single-invocation (grid-free) design assumes full VMEM residency; "
        "reintroduce a grid over (N, Lq) before growing shapes further")
    # TODO(synk): for large N add a leading 'parallel' grid axis over N so the
    # second TensorCore on v7x is used; at N=2 per-step overhead dominates.

    return pl.pallas_call(
        _mha_kernel,
        out_shape=(
            jax.ShapeDtypeStruct((N, L, E), jnp.float32),
            jax.ShapeDtypeStruct((N, L, L), jnp.float32),
        ),
        # No grid / no BlockSpecs: whole (tiny) arrays live in VMEM for one
        # invocation — the problem is overhead-dominated, so the biggest win
        # is removing per-step pipeline overhead and extra DMAs entirely.
    )(x_stacked.astype(jnp.float32), packed_params)


def _reference(x_stacked, in_proj_w, in_proj_b, out_proj_w, out_proj_b):
    """Plain-JAX reference of the same math (correctness gate)."""
    N, L, E = x_stacked.shape
    hp = jax.lax.Precision.HIGHEST
    qkv = jnp.einsum('nle,fe->nlf', x_stacked, in_proj_w, precision=hp) + in_proj_b
    q, k, v = qkv[..., :E], qkv[..., E:2 * E], qkv[..., 2 * E:]
    # num_heads == E, head_dim == 1 -> scale == 1.0
    scores = jnp.einsum('nih,njh->nhij', q, k, precision=hp)
    attn = jax.nn.softmax(scores, axis=-1)
    ctx = jnp.einsum('nhij,njh->nih', attn, v, precision=hp)
    out = jnp.einsum('nih,oh->nio', ctx, out_proj_w, precision=hp) + out_proj_b
    return out, jnp.mean(attn, axis=1)


if __name__ == "__main__":
    # Module hyper-params (num_layers / output_size are unused by forward()).
    hidden_size = 8          # embed_dim == num_heads == 8 -> head_dim == 1
    seq_len = 8
    num_inputs = 2           # length of the `inputs` list

    key = jax.random.PRNGKey(0)
    k_x, k_win, k_bin, k_wout, k_bout = jax.random.split(key, 5)

    # `inputs` list -> stacked (N, L, E)
    x = jax.random.normal(k_x, (num_inputs, seq_len, hidden_size), jnp.float32)

    # Deterministic synthetic parameters (PyTorch nn.MultiheadAttention layout).
    in_proj_w = 0.3 * jax.random.normal(k_win, (3 * hidden_size, hidden_size), jnp.float32)
    in_proj_b = 0.1 * jax.random.normal(k_bin, (3 * hidden_size,), jnp.float32)
    out_proj_w = 0.3 * jax.random.normal(k_wout, (hidden_size, hidden_size), jnp.float32)
    out_proj_b = 0.1 * jax.random.normal(k_bout, (hidden_size,), jnp.float32)

    # One-time parameter packing (module-init analogue) — hoisted out of the
    # forward path so no per-call transpose/cast/reshape XLA ops remain.
    packed_params = jax.block_until_ready(
        pack_mha_params(in_proj_w, in_proj_b, out_proj_w, out_proj_b))

    outputs, attn_weights = agi_explainability_forward(x, packed_params)
    jax.block_until_ready((outputs, attn_weights))

    ref_out, ref_attn = _reference(x, in_proj_w, in_proj_b, out_proj_w, out_proj_b)
    assert jnp.allclose(outputs, ref_out, atol=1e-4, rtol=1e-4), \
        float(jnp.max(jnp.abs(outputs - ref_out)))
    assert jnp.allclose(attn_weights, ref_attn, atol=1e-4, rtol=1e-4), \
        float(jnp.max(jnp.abs(attn_weights - ref_attn)))

    # Mirror the module's return type: ([out_0, out_1, ...], [attn_0, attn_1, ...])
    outputs_list = [outputs[i] for i in range(num_inputs)]
    attn_list = [attn_weights[i] for i in range(num_inputs)]
    assert len(outputs_list) == num_inputs and len(attn_list) == num_inputs

    # TODO(synk): Visualizer.plot_attention (matplotlib display) has no TPU/
    # Pallas equivalent and is intentionally not implemented.
    print("KERNEL_OK")
</pallas_src>

<mosaic_0001>
module attributes {stable_mosaic.version = 11 : i64} {
  func.func @_mha_kernel(%arg0: memref<2x8x8xf32, #tpu.memory_space<vmem>>, %arg1: memref<9x32xf32, #tpu.memory_space<vmem>>, %arg2: memref<2x8x8xf32, #tpu.memory_space<vmem>>, %arg3: memref<2x8x8xf32, #tpu.memory_space<vmem>>) attributes {dimension_semantics = [], scalar_prefetch = 0 : i64, scratch_operands = 0 : i64, tpu.core_type = #tpu.core_type<tc>} {
    %c0 = arith.constant 0 : index
    %c0_0 = arith.constant 0 : index
    %0 = vector.load %arg1[%c0, %c0_0] : memref<9x32xf32, #tpu.memory_space<vmem>>, vector<8x24xf32>
    %c0_1 = arith.constant 0 : index
    %c24 = arith.constant 24 : index
    %1 = vector.load %arg1[%c0_1, %c24] : memref<9x32xf32, #tpu.memory_space<vmem>>, vector<8x8xf32>
    %c8 = arith.constant 8 : index
    %c0_2 = arith.constant 0 : index
    %2 = vector.load %arg1[%c8, %c0_2] : memref<9x32xf32, #tpu.memory_space<vmem>>, vector<1x24xf32>
    %c8_3 = arith.constant 8 : index
    %c24_4 = arith.constant 24 : index
    %3 = vector.load %arg1[%c8_3, %c24_4] : memref<9x32xf32, #tpu.memory_space<vmem>>, vector<1x8xf32>
    %c0_5 = arith.constant 0 : index
    %c0_6 = arith.constant 0 : index
    %c0_7 = arith.constant 0 : index
    %4 = vector.load %arg0[%c0_5, %c0_6, %c0_7] : memref<2x8x8xf32, #tpu.memory_space<vmem>>, vector<2x8x8xf32>
    %5 = vector.shape_cast %4 : vector<2x8x8xf32> to vector<16x8xf32>
    %cst = arith.constant dense<0.000000e+00> : vector<16x24xf32>
    %6 = tpu.matmul %5, %0, %cst {dimension_numbers = #tpu.dot_dimension_numbers<[1], [0], [0], [1], [0, 0, 1, 1], [], []>, precision = #tpu.contract_precision<fp32>} : vector<16x8xf32>, vector<8x24xf32>, vector<16x24xf32> -> vector<16x24xf32>
    %7 = vector.broadcast %2 : vector<1x24xf32> to vector<16x24xf32>
    %8 = arith.addf %6, %7 : vector<16x24xf32>
    %9 = vector.extract_strided_slice %8 {offsets = [0, 0], sizes = [16, 8], strides = [1, 1]} : vector<16x24xf32> to vector<16x8xf32>
    %10 = vector.shape_cast %9 : vector<16x8xf32> to vector<2x8x8xf32>
    %11 = vector.extract_strided_slice %8 {offsets = [0, 8], sizes = [16, 8], strides = [1, 1]} : vector<16x24xf32> to vector<16x8xf32>
    %12 = vector.shape_cast %11 : vector<16x8xf32> to vector<2x8x8xf32>
    %13 = vector.extract_strided_slice %8 {offsets = [0, 16], sizes = [16, 8], strides = [1, 1]} : vector<16x24xf32> to vector<16x8xf32>
    %14 = vector.shape_cast %13 : vector<16x8xf32> to vector<2x8x8xf32>
    %15 = vector.shape_cast %10 : vector<2x8x8xf32> to vector<2x8x1x8xf32>
    %16 = vector.shape_cast %12 : vector<2x8x8xf32> to vector<2x1x8x8xf32>
    %17 = vector.broadcast %15 : vector<2x8x1x8xf32> to vector<2x8x8x8xf32>
    %18 = vector.broadcast %16 : vector<2x1x8x8xf32> to vector<2x8x8x8xf32>
    %19 = arith.mulf %17, %18 : vector<2x8x8x8xf32>
    %cst_8 = arith.constant dense<0xFF800000> : vector<2x8x8xf32>
    %20 = vector.multi_reduction <maximumf>, %19, %cst_8 [2] : vector<2x8x8x8xf32> to vector<2x8x8xf32>
    %21 = vector.shape_cast %20 : vector<2x8x8xf32> to vector<2x8x1x8xf32>
    %22 = vector.broadcast %21 : vector<2x8x1x8xf32> to vector<2x8x8x8xf32>
    %23 = arith.subf %19, %22 : vector<2x8x8x8xf32>
    %24 = math.exp %23 : vector<2x8x8x8xf32>
    %cst_9 = arith.constant dense<0.000000e+00> : vector<2x8x8xf32>
    %25 = vector.multi_reduction <add>, %24, %cst_9 [2] : vector<2x8x8x8xf32> to vector<2x8x8xf32>
    %26 = vector.shape_cast %25 : vector<2x8x8xf32> to vector<2x8x1x8xf32>
    %27 = tpu.reciprocal %26 : vector<2x8x1x8xf32> -> vector<2x8x1x8xf32>
    %28 = vector.broadcast %27 : vector<2x8x1x8xf32> to vector<2x8x8x8xf32>
    %29 = arith.mulf %24, %28 : vector<2x8x8x8xf32>
    %30 = vector.shape_cast %14 : vector<2x8x8xf32> to vector<2x1x8x8xf32>
    %31 = vector.broadcast %30 : vector<2x1x8x8xf32> to vector<2x8x8x8xf32>
    %32 = arith.mulf %29, %31 : vector<2x8x8x8xf32>
    %cst_10 = arith.constant dense<0.000000e+00> : vector<2x8x8xf32>
    %33 = vector.multi_reduction <add>, %32, %cst_10 [2] : vector<2x8x8x8xf32> to vector<2x8x8xf32>
    %34 = vector.shape_cast %33 : vector<2x8x8xf32> to vector<16x8xf32>
    %cst_11 = arith.constant dense<0.000000e+00> : vector<16x8xf32>
    %35 = tpu.matmul %34, %1, %cst_11 {dimension_numbers = #tpu.dot_dimension_numbers<[1], [0], [0], [1], [0, 0, 1, 1], [], []>, precision = #tpu.contract_precision<fp32>} : vector<16x8xf32>, vector<8x8xf32>, vector<16x8xf32> -> vector<16x8xf32>
    %36 = vector.broadcast %3 : vector<1x8xf32> to vector<16x8xf32>
    %37 = arith.addf %35, %36 : vector<16x8xf32>
    %38 = vector.shape_cast %37 : vector<16x8xf32> to vector<2x8x8xf32>
    %c0_12 = arith.constant 0 : index
    %c0_13 = arith.constant 0 : index
    %c0_14 = arith.constant 0 : index
    %39 = vector.load %arg2[%c0_12, %c0_13, %c0_14] : memref<2x8x8xf32, #tpu.memory_space<vmem>>, vector<2x8x8xf32>
    tpu.vector_store %arg2[%c0_12, %c0_13, %c0_14], %38 {strides = array<i32>} : memref<2x8x8xf32, #tpu.memory_space<vmem>>, vector<2x8x8xf32>,
    %cst_15 = arith.constant dense<0.000000e+00> : vector<2x8x8xf32>
    %40 = vector.multi_reduction <add>, %29, %cst_15 [3] : vector<2x8x8x8xf32> to vector<2x8x8xf32>
    %cst_16 = arith.constant 8.000000e+00 : f32
    %41 = vector.broadcast %cst_16 : f32 to vector<2x8x8xf32>
    %42 = arith.divf %40, %41 : vector<2x8x8xf32>
    %c0_17 = arith.constant 0 : index
    %c0_18 = arith.constant 0 : index
    %c0_19 = arith.constant 0 : index
    %43 = vector.load %arg3[%c0_17, %c0_18, %c0_19] : memref<2x8x8xf32, #tpu.memory_space<vmem>>, vector<2x8x8xf32>
    tpu.vector_store %arg3[%c0_17, %c0_18, %c0_19], %42 {strides = array<i32>} : memref<2x8x8xf32, #tpu.memory_space<vmem>>, vector<2x8x8xf32>,
    return
  }
}

</mosaic_0001>

<llo_original>
// kernel: agi_explainability_forward.1
$region0: #{agi_explainability_forward.1}
  #allocation0 [shape = 'u32[]', space=smem, size = 0x4, offset = 0x4, fixed_abs, tag = 'smem constant byte address 0x4 - core index']
  #allocation1 [shape = 'u32[144,128]{1,0:T(1,128)}', space=vmem, size = 0x12000, scoped, tag = 'internal scratch']
  %s0 = inlined_call_operand.hbm [shape: f32[2,8,8], index: 0, kind: input, shape index: {}]
  %s1 = inlined_call_operand.hbm [shape: f32[9,32], index: 1, kind: input, shape index: {}]
  %s2 = inlined_call_operand.hbm [shape: f32[2,8,8], index: 2, kind: output, shape index: {0}]
  %s3 = inlined_call_operand.hbm [shape: f32[2,8,8], index: 3, kind: output, shape index: {1}]
  %4 = xla_tuple %s2, %s3
  %s5 = sld [smem:[#allocation0]]
  $region34: #{agi_explainability_forward.1} parent=0
    _
  %s7 = ssub.s32 1, %s5
  %s8 = scalar_select 0, %s7, %s5
  $region1: #{agi_explainability_forward.1} parent=0
    #allocation2 [shape = 'u8[8192]{0}', space=vmem, size = 0x2000, scoped, tag = 'input window, operand 0, single buffered']
    #allocation3 [shape = 's32[1]{0}', space=sflag, size = 0x4, scoped, tag = 'scoped memory for agi_explainability_forward.1']
    #allocation4 [shape = 's32[1]{0}', space=sflag, size = 0x4, scoped, tag = 'scoped memory for agi_explainability_forward.1']
    #allocation5 [shape = 'u8[8192]{0}', space=vmem, size = 0x2000, scoped, tag = 'input window, operand 1, single buffered']
    #allocation6 [shape = 's32[1]{0}', space=sflag, size = 0x4, scoped, tag = 'scoped memory for agi_explainability_forward.1']
    #allocation7 [shape = 'u8[8192]{0}', space=vmem, size = 0x2000, scoped, tag = 'output window, operand 0, single buffered']
    #allocation8 [shape = 'u8[8192]{0}', space=vmem, size = 0x2000, scoped, tag = 'output window, operand 1, single buffered']
    #allocation9 [shape = 's32[1]{0}', space=sflag, size = 0x4, scoped, tag = 'scoped memory for agi_explainability_forward.1']
    %9 = vsyncpa [#allocation3], 0
    %10 = vsyncpa [#allocation6], 0
    %11 = vsyncpa [#allocation4], 0
    %12 = vsyncpa [#allocation9], 0
    // Predicated region
    $region2: #{agi_explainability_forward.1} parent=1 // pred_check
      _
    $region3: #{agi_explainability_forward.1} parent=1 // pred_check_branch
      %14 = sbr.rel (0) target = $region5
    $region4: #{agi_explainability_forward.1} parent=1 // pred_region
      %s16 = ssub.s32 256, 256
      %17 = vsyncadd [#allocation3], %s16
      %s18 = sshll.u32 [#allocation2], 4
      %s19 = int_to_ptr.vmem [resolvable:$true] %s18
      %24 = dma.hbm_to_vmem [thread:$0]  %s0, 256, %s19, [#allocation3], 128, 128, 8
    $region5: #{agi_explainability_forward.1} parent=1 // pred_fallthru
      _
    // Predicated region
    $region6: #{agi_explainability_forward.1} parent=1 // pred_check
      _
    $region7: #{agi_explainability_forward.1} parent=1 // pred_check_branch
      %26 = sbr.rel (0) target = $region9
    $region8: #{agi_explainability_forward.1} parent=1 // pred_region
      %s28 = ssub.s32 256, 256
      %29 = vsyncadd [#allocation6], %s28
      %s30 = sshll.u32 [#allocation5], 4
      %s31 = int_to_ptr.vmem [resolvable:$true] %s30
      %36 = dma.hbm_to_vmem [thread:$0]  %s1, 256, %s31, [#allocation6], 128, 128, 8
    $region9: #{agi_explainability_forward.1} parent=1 // pred_fallthru
      _
    // Predicated region
    $region10: #{agi_explainability_forward.1} parent=1 // pred_check
      _
    $region11: #{agi_explainability_forward.1} parent=1 // pred_check_branch
      %38 = sbr.rel (0) target = $region13
    $region12: #{agi_explainability_forward.1} parent=1 // pred_region
      %39 = dma.done [#allocation3], 256
    $region13: #{agi_explainability_forward.1} parent=1 // pred_fallthru
      _
    // Predicated region
    $region14: #{agi_explainability_forward.1} parent=1 // pred_check
      _
    $region15: #{agi_explainability_forward.1} parent=1 // pred_check_branch
      %41 = sbr.rel (0) target = $region17
    $region16: #{agi_explainability_forward.1} parent=1 // pred_region
      %42 = dma.done [#allocation6], 256
    $region17: #{agi_explainability_forward.1} parent=1 // pred_fallthru
      _
    %v43 = vld [vmem:[#allocation5] sm:$0xff]
    %v44 = vld [vmem:[#allocation5 + $0x8] sm:$0x1]
    %v45 = vld [vmem:[#allocation2] sm:$0xff]
    %v46 = vld [vmem:[#allocation2 + $0x8] sm:$0xff]
    %v47 = vlaneseq
    %v48 = vshrl.u32 %v47, 7
    %v49 = vsub.s32 0, %v48
    %v50 = vrot.slane %v44, %v49
    %vm51 = vcmask 64512
    %v53 = vsel %vm51, %v45, 0
    %v56 = vsel %vm51, %v46, 0
    %58 = vmatprep.subr.mxu0 0.0
    %v59 = vand.u32 %v43, 4294901760
    %60 = vmatpush1.msra.mxu0 %v59
    %61 = vmatprep.subr.mxu0 0.0
    %62 = vmatpush1.msra.mxu0 0.0
    %63 = vmatprep.subr.mxu0 0.0
    %64 = vmatpush1.msra.mxu0 0.0
    %65 = vmatprep.subr.mxu0 0.0
    %66 = vmatpush1.msra.mxu0 0.0
    %67 = vmatprep.subr.mxu0 0.0
    %68 = vmatpush1.msra.mxu0 0.0
    %69 = vmatprep.subr.mxu0 0.0
    %70 = vmatpush1.msra.mxu0 0.0
    %71 = vmatprep.subr.mxu0 0.0
    %72 = vmatpush1.msra.mxu0 0.0
    %73 = vmatprep.subr.mxu0 0.0
    %74 = vmatpush1.msra.mxu0 0.0
    %75 = vmatprep.subr.mxu0 0.0
    %76 = vmatpush1.msra.mxu0 0.0
    %77 = vmatprep.subr.mxu0 0.0
    %78 = vmatpush1.msra.mxu0 0.0
    %79 = vmatprep.subr.mxu0 0.0
    %80 = vmatpush1.msra.mxu0 0.0
    %81 = vmatprep.subr.mxu0 0.0
    %82 = vmatpush1.msra.mxu0 0.0
    %83 = vmatprep.subr.mxu0 0.0
    %84 = vmatpush1.msra.mxu0 0.0
    %85 = vmatprep.subr.mxu0 0.0
    %86 = vmatpush1.msra.mxu0 0.0
    %87 = vmatprep.subr.mxu0 0.0
    %88 = vmatpush1.msra.mxu0 0.0
    %89 = vmatprep.subr.mxu0 0.0
    %90 = vmatpush1.msra.mxu0 0.0
    %91 = vmatprep.subr.mxu0 0.0
    %92 = vmatpush1.msra.mxu0 0.0
    %93 = vmatprep.subr.mxu0 0.0
    %94 = vmatpush1.msra.mxu0 0.0
    %95 = vmatprep.subr.mxu0 0.0
    %96 = vmatpush1.msra.mxu0 0.0
    %97 = vmatprep.subr.mxu0 0.0
    %98 = vmatpush1.msra.mxu0 0.0
    %99 = vmatprep.subr.mxu0 0.0
    %100 = vmatpush1.msra.mxu0 0.0
    %101 = vmatprep.subr.mxu0 0.0
    %102 = vmatpush1.msra.mxu0 0.0
    %103 = vmatprep.subr.mxu0 0.0
    %104 = vmatpush1.msra.mxu0 0.0
    %105 = vmatprep.subr.mxu0 0.0
    %106 = vmatpush1.msra.mxu0 0.0
    %107 = vmatprep.subr.mxu0 0.0
    %108 = vmatpush1.msra.mxu0 0.0
    %109 = vmatprep.subr.mxu0 0.0
    %110 = vmatpush1.msra.mxu0 0.0
    %111 = vmatprep.subr.mxu0 0.0
    %112 = vmatpush1.msra.mxu0 0.0
    %113 = vmatprep.subr.mxu0 0.0
    %114 = vmatpush1.msra.mxu0 0.0
    %115 = vmatprep.subr.mxu0 0.0
    %116 = vmatpush1.msra.mxu0 0.0
    %117 = vmatprep.subr.mxu0 0.0
    %118 = vmatpush1.msra.mxu0 0.0
    %119 = vmatprep.subr.mxu0 0.0
    %120 = vmatpush1.msra.mxu0 0.0
    %121 = vmatprep.subr.mxu0 0.0
    %122 = vmatpush1.msra.mxu0 0.0
    %123 = vmatprep.mubr.f32.mxu0 0.0
    %v124 = vand.u32 %v53, 4294901760
    %v125 = vsub.f32 %v53, %v124
    %v126 = vand.u32 %v125, 4294901760
    %v127 = vsub.f32 %v125, %v126
    %v128 = vand.u32 %v127, 4294901760
    %129 = vmatmul.mubr.f32.gmra.mrb[0].mxu0 %v128
    %v130 = vpop.f32.mrb[0].mxu0
    %v131 = vadd.f32 %v50, %v130
    %v132 = vpop.f32.mrb[0].mxu0
    %133 = vmatprep.mubr.f32.mxu0 0.0
    %v134 = vand.u32 %v56, 4294901760
    %v135 = vsub.f32 %v56, %v134
    %v136 = vand.u32 %v135, 4294901760
    %v137 = vsub.f32 %v135, %v136
    %v138 = vand.u32 %v137, 4294901760
    %139 = vmatmul.mubr.f32.gmra.mrb[0].mxu0 %v138
    %v140 = vpop.f32.mrb[0].mxu0
    %v141 = vadd.f32 %v50, %v140
    %v142 = vpop.f32.mrb[0].mxu0
    %143 = vdwg.mxu0
    %144 = vmatprep.subr.mxu0 0.0
    %v145 = vand.u32 %v43, 4294901760
    %v146 = vsub.f32 %v43, %v145
    %v147 = vand.u32 %v146, 4294901760
    %v148 = vsub.f32 %v146, %v147
    %v149 = vand.u32 %v148, 4294901760
    %150 = vmatpush1.msra.mxu0 %v149
    %151 = vmatprep.subr.mxu0 0.0
    %152 = vmatpush1.msra.mxu0 0.0
    %153 = vmatprep.subr.mxu0 0.0
    %154 = vmatpush1.msra.mxu0 0.0
    %155 = vmatprep.subr.mxu0 0.0
    %156 = vmatpush1.msra.mxu0 0.0
    %157 = vmatprep.subr.mxu0 0.0
    %158 = vmatpush1.msra.mxu0 0.0
    %159 = vmatprep.subr.mxu0 0.0
    %160 = vmatpush1.msra.mxu0 0.0
    %161 = vmatprep.subr.mxu0 0.0
    %162 = vmatpush1.msra.mxu0 0.0
    %163 = vmatprep.subr.mxu0 0.0
    %164 = vmatpush1.msra.mxu0 0.0
    %165 = vmatprep.subr.mxu0 0.0
    %166 = vmatpush1.msra.mxu0 0.0
    %167 = vmatprep.subr.mxu0 0.0
    %168 = vmatpush1.msra.mxu0 0.0
    %169 = vmatprep.subr.mxu0 0.0
    %170 = vmatpush1.msra.mxu0 0.0
    %171 = vmatprep.subr.mxu0 0.0
    %172 = vmatpush1.msra.mxu0 0.0
    %173 = vmatprep.subr.mxu0 0.0
    %174 = vmatpush1.msra.mxu0 0.0
    %175 = vmatprep.subr.mxu0 0.0
    %176 = vmatpush1.msra.mxu0 0.0
    %177 = vmatprep.subr.mxu0 0.0
    %178 = vmatpush1.msra.mxu0 0.0
    %179 = vmatprep.subr.mxu0 0.0
    %180 = vmatpush1.msra.mxu0 0.0
    %181 = vmatprep.subr.mxu0 0.0
    %182 = vmatpush1.msra.mxu0 0.0
    %183 = vmatprep.subr.mxu0 0.0
    %184 = vmatpush1.msra.mxu0 0.0
    %185 = vmatprep.subr.mxu0 0.0
    %186 = vmatpush1.msra.mxu0 0.0
    %187 = vmatprep.subr.mxu0 0.0
    %188 = vmatpush1.msra.mxu0 0.0
    %189 = vmatprep.subr.mxu0 0.0
    %190 = vmatpush1.msra.mxu0 0.0
    %191 = vmatprep.subr.mxu0 0.0
    %192 = vmatpush1.msra.mxu0 0.0
    %193 = vmatprep.subr.mxu0 0.0
    %194 = vmatpush1.msra.mxu0 0.0
    %195 = vmatprep.subr.mxu0 0.0
    %196 = vmatpush1.msra.mxu0 0.0
    %197 = vmatprep.subr.mxu0 0.0
    %198 = vmatpush1.msra.mxu0 0.0
    %199 = vmatprep.subr.mxu0 0.0
    %200 = vmatpush1.msra.mxu0 0.0
    %201 = vmatprep.subr.mxu0 0.0
    %202 = vmatpush1.msra.mxu0 0.0
    %203 = vmatprep.subr.mxu0 0.0
    %204 = vmatpush1.msra.mxu0 0.0
    %205 = vmatprep.subr.mxu0 0.0
    %206 = vmatpush1.msra.mxu0 0.0
    %207 = vmatprep.subr.mxu0 0.0
    %208 = vmatpush1.msra.mxu0 0.0
    %209 = vmatprep.subr.mxu0 0.0
    %210 = vmatpush1.msra.mxu0 0.0
    %211 = vmatprep.subr.mxu0 0.0
    %212 = vmatpush1.msra.mxu0 0.0
    %213 = vmatprep.mubr.f32.mxu0 0.0
    %v214 = vand.u32 %v53, 4294901760
    %215 = vmatmul.mubr.f32.gmra.mrb[0].mxu0 %v214
    %v216 = vpop.f32.mrb[0].mxu0
    %v217 = vadd.f32 %v131, %v216
    %v218 = vpop.f32.mrb[0].mxu0
    %219 = vmatprep.mubr.f32.mxu0 0.0
    %v220 = vand.u32 %v56, 4294901760
    %221 = vmatmul.mubr.f32.gmra.mrb[0].mxu0 %v220
    %v222 = vpop.f32.mrb[0].mxu0
    %v223 = vadd.f32 %v141, %v222
    %v224 = vpop.f32.mrb[0].mxu0
    %225 = vdwg.mxu0
    %226 = vmatprep.subr.mxu0 0.0
    %v227 = vand.u32 %v43, 4294901760
    %v228 = vsub.f32 %v43, %v227
    %229 = vmatpush1.msra.mxu0 %v228
    %230 = vmatprep.subr.mxu0 0.0
    %231 = vmatpush1.msra.mxu0 0.0
    %232 = vmatprep.subr.mxu0 0.0
    %233 = vmatpush1.msra.mxu0 0.0
    %234 = vmatprep.subr.mxu0 0.0
    %235 = vmatpush1.msra.mxu0 0.0
    %236 = vmatprep.subr.mxu0 0.0
    %237 = vmatpush1.msra.mxu0 0.0
    %238 = vmatprep.subr.mxu0 0.0
    %239 = vmatpush1.msra.mxu0 0.0
    %240 = vmatprep.subr.mxu0 0.0
    %241 = vmatpush1.msra.mxu0 0.0
    %242 = vmatprep.subr.mxu0 0.0
    %243 = vmatpush1.msra.mxu0 0.0
    %244 = vmatprep.subr.mxu0 0.0
    %245 = vmatpush1.msra.mxu0 0.0
    %246 = vmatprep.subr.mxu0 0.0
    %247 = vmatpush1.msra.mxu0 0.0
    %248 = vmatprep.subr.mxu0 0.0
    %249 = vmatpush1.msra.mxu0 0.0
    %250 = vmatprep.subr.mxu0 0.0
    %251 = vmatpush1.msra.mxu0 0.0
    %252 = vmatprep.subr.mxu0 0.0
    %253 = vmatpush1.msra.mxu0 0.0
    %254 = vmatprep.subr.mxu0 0.0
    %255 = vmatpush1.msra.mxu0 0.0
    %256 = vmatprep.subr.mxu0 0.0
    %257 = vmatpush1.msra.mxu0 0.0
    %258 = vmatprep.subr.mxu0 0.0
    %259 = vmatpush1.msra.mxu0 0.0
    %260 = vmatprep.subr.mxu0 0.0
    %261 = vmatpush1.msra.mxu0 0.0
    %262 = vmatprep.subr.mxu0 0.0
    %263 = vmatpush1.msra.mxu0 0.0
    %264 = vmatprep.subr.mxu0 0.0
    %265 = vmatpush1.msra.mxu0 0.0
    %266 = vmatprep.subr.mxu0 0.0
    %267 = vmatpush1.msra.mxu0 0.0
    %268 = vmatprep.subr.mxu0 0.0
    %269 = vmatpush1.msra.mxu0 0.0
    %270 = vmatprep.subr.mxu0 0.0
    %271 = vmatpush1.msra.mxu0 0.0
    %272 = vmatprep.subr.mxu0 0.0
    %273 = vmatpush1.msra.mxu0 0.0
    %274 = vmatprep.subr.mxu0 0.0
    %275 = vmatpush1.msra.mxu0 0.0
    %276 = vmatprep.subr.mxu0 0.0
    %277 = vmatpush1.msra.mxu0 0.0
    %278 = vmatprep.subr.mxu0 0.0
    %279 = vmatpush1.msra.mxu0 0.0
    %280 = vmatprep.subr.mxu0 0.0
    %281 = vmatpush1.msra.mxu0 0.0
    %282 = vmatprep.subr.mxu0 0.0
    %283 = vmatpush1.msra.mxu0 0.0
    %284 = vmatprep.subr.mxu0 0.0
    %285 = vmatpush1.msra.mxu0 0.0
    %286 = vmatprep.subr.mxu0 0.0
    %287 = vmatpush1.msra.mxu0 0.0
    %288 = vmatprep.subr.mxu0 0.0
    %289 = vmatpush1.msra.mxu0 0.0
    %290 = vmatprep.subr.mxu0 0.0
    %291 = vmatpush1.msra.mxu0 0.0
    %292 = vmatprep.mubr.f32.mxu0 0.0
    %v293 = vand.u32 %v53, 4294901760
    %v294 = vsub.f32 %v53, %v293
    %295 = vmatmul.mubr.f32.gmra.mrb[0].mxu0 %v294
    %v296 = vpop.f32.mrb[0].mxu0
    %v297 = vadd.f32 %v217, %v296
    %v298 = vpop.f32.mrb[0].mxu0
    %299 = vmatprep.mubr.f32.mxu0 0.0
    %v300 = vand.u32 %v56, 4294901760
    %v301 = vsub.f32 %v56, %v300
    %302 = vmatmul.mubr.f32.gmra.mrb[0].mxu0 %v301
    %v303 = vpop.f32.mrb[0].mxu0
    %v304 = vadd.f32 %v223, %v303
    %v305 = vpop.f32.mrb[0].mxu0
    %306 = vdwg.mxu0
    %307 = vmatprep.subr.mxu0 0.0
    %v308 = vand.u32 %v43, 4294901760
    %309 = vmatpush1.msra.mxu0 %v308
    %310 = vmatprep.subr.mxu0 0.0
    %311 = vmatpush1.msra.mxu0 0.0
    %312 = vmatprep.subr.mxu0 0.0
    %313 = vmatpush1.msra.mxu0 0.0
    %314 = vmatprep.subr.mxu0 0.0
    %315 = vmatpush1.msra.mxu0 0.0
    %316 = vmatprep.subr.mxu0 0.0
    %317 = vmatpush1.msra.mxu0 0.0
    %318 = vmatprep.subr.mxu0 0.0
    %319 = vmatpush1.msra.mxu0 0.0
    %320 = vmatprep.subr.mxu0 0.0
    %321 = vmatpush1.msra.mxu0 0.0
    %322 = vmatprep.subr.mxu0 0.0
    %323 = vmatpush1.msra.mxu0 0.0
    %324 = vmatprep.subr.mxu0 0.0
    %325 = vmatpush1.msra.mxu0 0.0
    %326 = vmatprep.subr.mxu0 0.0
    %327 = vmatpush1.msra.mxu0 0.0
    %328 = vmatprep.subr.mxu0 0.0
    %329 = vmatpush1.msra.mxu0 0.0
    %330 = vmatprep.subr.mxu0 0.0
    %331 = vmatpush1.msra.mxu0 0.0
    %332 = vmatprep.subr.mxu0 0.0
    %333 = vmatpush1.msra.mxu0 0.0
    %334 = vmatprep.subr.mxu0 0.0
    %335 = vmatpush1.msra.mxu0 0.0
    %336 = vmatprep.subr.mxu0 0.0
    %337 = vmatpush1.msra.mxu0 0.0
    %338 = vmatprep.subr.mxu0 0.0
    %339 = vmatpush1.msra.mxu0 0.0
    %340 = vmatprep.subr.mxu0 0.0
    %341 = vmatpush1.msra.mxu0 0.0
    %342 = vmatprep.subr.mxu0 0.0
    %343 = vmatpush1.msra.mxu0 0.0
    %344 = vmatprep.subr.mxu0 0.0
    %345 = vmatpush1.msra.mxu0 0.0
    %346 = vmatprep.subr.mxu0 0.0
    %347 = vmatpush1.msra.mxu0 0.0
    %348 = vmatprep.subr.mxu0 0.0
    %349 = vmatpush1.msra.mxu0 0.0
    %350 = vmatprep.subr.mxu0 0.0
    %351 = vmatpush1.msra.mxu0 0.0
    %352 = vmatprep.subr.mxu0 0.0
    %353 = vmatpush1.msra.mxu0 0.0
    %354 = vmatprep.subr.mxu0 0.0
    %355 = vmatpush1.msra.mxu0 0.0
    %356 = vmatprep.subr.mxu0 0.0
    %357 = vmatpush1.msra.mxu0 0.0
    %358 = vmatprep.subr.mxu0 0.0
    %359 = vmatpush1.msra.mxu0 0.0
    %360 = vmatprep.subr.mxu0 0.0
    %361 = vmatpush1.msra.mxu0 0.0
    %362 = vmatprep.subr.mxu0 0.0
    %363 = vmatpush1.msra.mxu0 0.0
    %364 = vmatprep.subr.mxu0 0.0
    %365 = vmatpush1.msra.mxu0 0.0
    %366 = vmatprep.subr.mxu0 0.0
    %367 = vmatpush1.msra.mxu0 0.0
    %368 = vmatprep.subr.mxu0 0.0
    %369 = vmatpush1.msra.mxu0 0.0
    %370 = vmatprep.subr.mxu0 0.0
    %371 = vmatpush1.msra.mxu0 0.0
    %372 = vmatprep.mubr.f32.mxu0 0.0
    %v373 = vand.u32 %v53, 4294901760
    %v374 = vsub.f32 %v53, %v373
    %v375 = vand.u32 %v374, 4294901760
    %376 = vmatmul.mubr.f32.gmra.mrb[0].mxu0 %v375
    %v377 = vpop.f32.mrb[0].mxu0
    %v378 = vadd.f32 %v297, %v377
    %v379 = vpop.f32.mrb[0].mxu0
    %380 = vmatprep.mubr.f32.mxu0 0.0
    %v381 = vand.u32 %v56, 4294901760
    %v382 = vsub.f32 %v56, %v381
    %v383 = vand.u32 %v382, 4294901760
    %384 = vmatmul.mubr.f32.gmra.mrb[0].mxu0 %v383
    %v385 = vpop.f32.mrb[0].mxu0
    %v386 = vadd.f32 %v304, %v385
    %v387 = vpop.f32.mrb[0].mxu0
    %388 = vdwg.mxu0
    %389 = vmatprep.subr.mxu0 0.0
    %v390 = vand.u32 %v43, 4294901760
    %v391 = vsub.f32 %v43, %v390
    %v392 = vand.u32 %v391, 4294901760
    %393 = vmatpush1.msra.mxu0 %v392
    %394 = vmatprep.subr.mxu0 0.0
    %395 = vmatpush1.msra.mxu0 0.0
    %396 = vmatprep.subr.mxu0 0.0
    %397 = vmatpush1.msra.mxu0 0.0
    %398 = vmatprep.subr.mxu0 0.0
    %399 = vmatpush1.msra.mxu0 0.0
    %400 = vmatprep.subr.mxu0 0.0
    %401 = vmatpush1.msra.mxu0 0.0
    %402 = vmatprep.subr.mxu0 0.0
    %403 = vmatpush1.msra.mxu0 0.0
    %404 = vmatprep.subr.mxu0 0.0
    %405 = vmatpush1.msra.mxu0 0.0
    %406 = vmatprep.subr.mxu0 0.0
    %407 = vmatpush1.msra.mxu0 0.0
    %408 = vmatprep.subr.mxu0 0.0
    %409 = vmatpush1.msra.mxu0 0.0
    %410 = vmatprep.subr.mxu0 0.0
    %411 = vmatpush1.msra.mxu0 0.0
    %412 = vmatprep.subr.mxu0 0.0
    %413 = vmatpush1.msra.mxu0 0.0
    %414 = vmatprep.subr.mxu0 0.0
    %415 = vmatpush1.msra.mxu0 0.0
    %416 = vmatprep.subr.mxu0 0.0
    %417 = vmatpush1.msra.mxu0 0.0
    %418 = vmatprep.subr.mxu0 0.0
    %419 = vmatpush1.msra.mxu0 0.0
    %420 = vmatprep.subr.mxu0 0.0
    %421 = vmatpush1.msra.mxu0 0.0
    %422 = vmatprep.subr.mxu0 0.0
    %423 = vmatpush1.msra.mxu0 0.0
    %424 = vmatprep.subr.mxu0 0.0
    %425 = vmatpush1.msra.mxu0 0.0
    %426 = vmatprep.subr.mxu0 0.0
    %427 = vmatpush1.msra.mxu0 0.0
    %428 = vmatprep.subr.mxu0 0.0
    %429 = vmatpush1.msra.mxu0 0.0
    %430 = vmatprep.subr.mxu0 0.0
    %431 = vmatpush1.msra.mxu0 0.0
    %432 = vmatprep.subr.mxu0 0.0
    %433 = vmatpush1.msra.mxu0 0.0
    %434 = vmatprep.subr.mxu0 0.0
    %435 = vmatpush1.msra.mxu0 0.0
    %436 = vmatprep.subr.mxu0 0.0
    %437 = vmatpush1.msra.mxu0 0.0
    %438 = vmatprep.subr.mxu0 0.0
    %439 = vmatpush1.msra.mxu0 0.0
    %440 = vmatprep.subr.mxu0 0.0
    %441 = vmatpush1.msra.mxu0 0.0
    %442 = vmatprep.subr.mxu0 0.0
    %443 = vmatpush1.msra.mxu0 0.0
    %444 = vmatprep.subr.mxu0 0.0
    %445 = vmatpush1.msra.mxu0 0.0
    %446 = vmatprep.subr.mxu0 0.0
    %447 = vmatpush1.msra.mxu0 0.0
    %448 = vmatprep.subr.mxu0 0.0
    %449 = vmatpush1.msra.mxu0 0.0
    %450 = vmatprep.subr.mxu0 0.0
    %451 = vmatpush1.msra.mxu0 0.0
    %452 = vmatprep.subr.mxu0 0.0
    %453 = vmatpush1.msra.mxu0 0.0
    %454 = vmatprep.subr.mxu0 0.0
    %455 = vmatpush1.msra.mxu0 0.0
    %456 = vmatprep.mubr.f32.mxu0 0.0
    %v457 = vand.u32 %v53, 4294901760
    %458 = vmatmul.mubr.f32.gmra.mrb[0].mxu0 %v457
    %v459 = vpop.f32.mrb[0].mxu0
    %v460 = vadd.f32 %v378, %v459
    %v461 = vpop.f32.mrb[0].mxu0
    %462 = vmatprep.mubr.f32.mxu0 0.0
    %v463 = vand.u32 %v56, 4294901760
    %464 = vmatmul.mubr.f32.gmra.mrb[0].mxu0 %v463
    %v465 = vpop.f32.mrb[0].mxu0
    %v466 = vadd.f32 %v386, %v465
    %v467 = vpop.f32.mrb[0].mxu0
    %468 = vdwg.mxu0
    %469 = vmatprep.subr.mxu0 0.0
    %v470 = vand.u32 %v43, 4294901760
    %471 = vmatpush1.msra.mxu0 %v470
    %472 = vmatprep.subr.mxu0 0.0
    %473 = vmatpush1.msra.mxu0 0.0
    %474 = vmatprep.subr.mxu0 0.0
    %475 = vmatpush1.msra.mxu0 0.0
    %476 = vmatprep.subr.mxu0 0.0
    %477 = vmatpush1.msra.mxu0 0.0
    %478 = vmatprep.subr.mxu0 0.0
    %479 = vmatpush1.msra.mxu0 0.0
    %480 = vmatprep.subr.mxu0 0.0
    %481 = vmatpush1.msra.mxu0 0.0
    %482 = vmatprep.subr.mxu0 0.0
    %483 = vmatpush1.msra.mxu0 0.0
    %484 = vmatprep.subr.mxu0 0.0
    %485 = vmatpush1.msra.mxu0 0.0
    %486 = vmatprep.subr.mxu0 0.0
    %487 = vmatpush1.msra.mxu0 0.0
    %488 = vmatprep.subr.mxu0 0.0
    %489 = vmatpush1.msra.mxu0 0.0
    %490 = vmatprep.subr.mxu0 0.0
    %491 = vmatpush1.msra.mxu0 0.0
    %492 = vmatprep.subr.mxu0 0.0
    %493 = vmatpush1.msra.mxu0 0.0
    %494 = vmatprep.subr.mxu0 0.0
    %495 = vmatpush1.msra.mxu0 0.0
    %496 = vmatprep.subr.mxu0 0.0
    %497 = vmatpush1.msra.mxu0 0.0
    %498 = vmatprep.subr.mxu0 0.0
    %499 = vmatpush1.msra.mxu0 0.0
    %500 = vmatprep.subr.mxu0 0.0
    %501 = vmatpush1.msra.mxu0 0.0
    %502 = vmatprep.subr.mxu0 0.0
    %503 = vmatpush1.msra.mxu0 0.0
    %504 = vmatprep.subr.mxu0 0.0
    %505 = vmatpush1.msra.mxu0 0.0
    %506 = vmatprep.subr.mxu0 0.0
    %507 = vmatpush1.msra.mxu0 0.0
    %508 = vmatprep.subr.mxu0 0.0
    %509 = vmatpush1.msra.mxu0 0.0
    %510 = vmatprep.subr.mxu0 0.0
    %511 = vmatpush1.msra.mxu0 0.0
    %512 = vmatprep.subr.mxu0 0.0
    %513 = vmatpush1.msra.mxu0 0.0
    %514 = vmatprep.subr.mxu0 0.0
    %515 = vmatpush1.msra.mxu0 0.0
    %516 = vmatprep.subr.mxu0 0.0
    %517 = vmatpush1.msra.mxu0 0.0
    %518 = vmatprep.subr.mxu0 0.0
    %519 = vmatpush1.msra.mxu0 0.0
    %520 = vmatprep.subr.mxu0 0.0
    %521 = vmatpush1.msra.mxu0 0.0
    %522 = vmatprep.subr.mxu0 0.0
    %523 = vmatpush1.msra.mxu0 0.0
    %524 = vmatprep.subr.mxu0 0.0
    %525 = vmatpush1.msra.mxu0 0.0
    %526 = vmatprep.subr.mxu0 0.0
    %527 = vmatpush1.msra.mxu0 0.0
    %528 = vmatprep.subr.mxu0 0.0
    %529 = vmatpush1.msra.mxu0 0.0
    %530 = vmatprep.subr.mxu0 0.0
    %531 = vmatpush1.msra.mxu0 0.0
    %532 = vmatprep.subr.mxu0 0.0
    %533 = vmatpush1.msra.mxu0 0.0
    %534 = vmatprep.mubr.f32.mxu0 0.0
    %v535 = vand.u32 %v53, 4294901760
    %536 = vmatmul.mubr.f32.gmra.mrb[0].mxu0 %v535
    %v537 = vpop.f32.mrb[0].mxu0
    %v538 = vadd.f32 %v460, %v537
    %v539 = vpop.f32.mrb[0].mxu0
    %540 = vmatprep.mubr.f32.mxu0 0.0
    %v541 = vand.u32 %v56, 4294901760
    %542 = vmatmul.mubr.f32.gmra.mrb[0].mxu0 %v541
    %v543 = vpop.f32.mrb[0].mxu0
    %v544 = vadd.f32 %v466, %v543
    %v545 = vpop.f32.mrb[0].mxu0
    %546 = vdwg.mxu0
    %v549 = vcombine.high %v538, %v538
    %v551 = vunpack.c.l.s4 1966171168
    %v552 = vunpack.c.0.s8 %v551
    %v553 = vlaneseq
    %v554 = vshrl.u32 %v553, 7
    %v555 = vsub.s32 %v552, %v554
    %v556 = vrot.slane %v538, %v555
    %v558 = vunpack.c.l.s4 1966171168
    %v559 = vunpack.c.0.s8 %v558
    %v560 = vlaneseq
    %v561 = vshrl.u32 %v560, 7
    %v562 = vsub.s32 %v559, %v561
    %v563 = vrot.slane %v549, %v562
    %v564 = vcombine.high %v556, %v556
    %v565 = vcombine.high %v563, %v563
    %v567 = vunpack.c.l.s4 1966171168
    %v568 = vunpack.c.0.s8 %v567
    %v569 = vlaneseq
    %v570 = vshrl.u32 %v569, 7
    %v571 = vsub.s32 %v568, %v570
    %v572 = vrot.slane %v556, %v571
    %v574 = vunpack.c.l.s4 1966171168
    %v575 = vunpack.c.0.s8 %v574
    %v576 = vlaneseq
    %v577 = vshrl.u32 %v576, 7
    %v578 = vsub.s32 %v575, %v577
    %v579 = vrot.slane %v563, %v578
    %v581 = vunpack.c.l.s4 1966171168
    %v582 = vunpack.c.0.s8 %v581
    %v583 = vlaneseq
    %v584 = vshrl.u32 %v583, 7
    %v585 = vsub.s32 %v582, %v584
    %v586 = vrot.slane %v564, %v585
    %v588 = vunpack.c.l.s4 1966171168
    %v589 = vunpack.c.0.s8 %v588
    %v590 = vlaneseq
    %v591 = vshrl.u32 %v590, 7
    %v592 = vsub.s32 %v589, %v591
    %v593 = vrot.slane %v565, %v592
    %v594 = vcombine.high %v572, %v572
    %v595 = vcombine.high %v579, %v579
    %v596 = vcombine.high %v586, %v586
    %v597 = vcombine.high %v593, %v593
    %v598 = vcombine.high %v544, %v544
    %v600 = vunpack.c.l.s4 1966171168
    %v601 = vunpack.c.0.s8 %v600
    %v602 = vlaneseq
    %v603 = vshrl.u32 %v602, 7
    %v604 = vsub.s32 %v601, %v603
    %v605 = vrot.slane %v544, %v604
    %v607 = vunpack.c.l.s4 1966171168
    %v608 = vunpack.c.0.s8 %v607
    %v609 = vlaneseq
    %v610 = vshrl.u32 %v609, 7
    %v611 = vsub.s32 %v608, %v610
    %v612 = vrot.slane %v598, %v611
    %v613 = vcombine.high %v605, %v605
    %v614 = vcombine.high %v612, %v612
    %v616 = vunpack.c.l.s4 1966171168
    %v617 = vunpack.c.0.s8 %v616
    %v618 = vlaneseq
    %v619 = vshrl.u32 %v618, 7
    %v620 = vsub.s32 %v617, %v619
    %v621 = vrot.slane %v605, %v620
    %v623 = vunpack.c.l.s4 1966171168
    %v624 = vunpack.c.0.s8 %v623
    %v625 = vlaneseq
    %v626 = vshrl.u32 %v625, 7
    %v627 = vsub.s32 %v624, %v626
    %v628 = vrot.slane %v612, %v627
    %v630 = vunpack.c.l.s4 1966171168
    %v631 = vunpack.c.0.s8 %v630
    %v632 = vlaneseq
    %v633 = vshrl.u32 %v632, 7
    %v634 = vsub.s32 %v631, %v633
    %v635 = vrot.slane %v613, %v634
    %v637 = vunpack.c.l.s4 1966171168
    %v638 = vunpack.c.0.s8 %v637
    %v639 = vlaneseq
    %v640 = vshrl.u32 %v639, 7
    %v641 = vsub.s32 %v638, %v640
    %v642 = vrot.slane %v614, %v641
    %v643 = vcombine.high %v621, %v621
    %v644 = vcombine.high %v628, %v628
    %v645 = vcombine.high %v635, %v635
    %v646 = vcombine.high %v642, %v642
    %v647 = vlaneseq
    %v648 = vshrl.u32 %v647, 7
    %v649 = vsub.s32 0, %v648
    %v650 = vrot.slane %v572, %v649
    %v651 = vlaneseq
    %v652 = vshrl.u32 %v651, 7
    %v653 = vsub.s32 0, %v652
    %v654 = vrot.slane %v586, %v653
    %v655 = vlaneseq
    %v656 = vshrl.u32 %v655, 7
    %v657 = vsub.s32 0, %v656
    %v658 = vrot.slane %v594, %v657
    %v659 = vlaneseq
    %v660 = vshrl.u32 %v659, 7
    %v661 = vsub.s32 0, %v660
    %v662 = vrot.slane %v596, %v661
    %v663 = vlaneseq
    %v664 = vshrl.u32 %v663, 7
    %v665 = vsub.s32 0, %v664
    %v666 = vrot.slane %v579, %v665
    %v667 = vlaneseq
    %v668 = vshrl.u32 %v667, 7
    %v669 = vsub.s32 0, %v668
    %v670 = vrot.slane %v593, %v669
    %v671 = vlaneseq
    %v672 = vshrl.u32 %v671, 7
    %v673 = vsub.s32 0, %v672
    %v674 = vrot.slane %v595, %v673
    %v675 = vlaneseq
    %v676 = vshrl.u32 %v675, 7
    %v677 = vsub.s32 0, %v676
    %v678 = vrot.slane %v597, %v677
    %v679 = vlaneseq
    %v680 = vshrl.u32 %v679, 7
    %v681 = vsub.s32 0, %v680
    %v682 = vrot.slane %v621, %v681
    %v683 = vlaneseq
    %v684 = vshrl.u32 %v683, 7
    %v685 = vsub.s32 0, %v684
    %v686 = vrot.slane %v635, %v685
    %v687 = vlaneseq
    %v688 = vshrl.u32 %v687, 7
    %v689 = vsub.s32 0, %v688
    %v690 = vrot.slane %v643, %v689
    %v691 = vlaneseq
    %v692 = vshrl.u32 %v691, 7
    %v693 = vsub.s32 0, %v692
    %v694 = vrot.slane %v645, %v693
    %v695 = vlaneseq
    %v696 = vshrl.u32 %v695, 7
    %v697 = vsub.s32 0, %v696
    %v698 = vrot.slane %v628, %v697
    %v699 = vlaneseq
    %v700 = vshrl.u32 %v699, 7
    %v701 = vsub.s32 0, %v700
    %v702 = vrot.slane %v642, %v701
    %v703 = vlaneseq
    %v704 = vshrl.u32 %v703, 7
    %v705 = vsub.s32 0, %v704
    %v706 = vrot.slane %v644, %v705
    %v707 = vlaneseq
    %v708 = vshrl.u32 %v707, 7
    %v709 = vsub.s32 0, %v708
    %v710 = vrot.slane %v646, %v709
    %727 = vrot.lane.b32.xlu0 %v538, 120
    %v728 = vpop.permute.xlu0 %727
    %729 = vrot.lane.b32.xlu0 %v544, 120
    %v730 = vpop.permute.xlu0 %729
    %v733 = vmul.f32 %v650, %v728
    %v734 = vmul.f32 %v654, %v728
    %v735 = vmul.f32 %v658, %v728
    %v736 = vmul.f32 %v662, %v728
    %v737 = vmul.f32 %v666, %v728
    %v738 = vmul.f32 %v670, %v728
    %v739 = vmul.f32 %v674, %v728
    %v740 = vmul.f32 %v678, %v728
    %v741 = vmul.f32 %v682, %v730
    %v742 = vmul.f32 %v686, %v730
    %v743 = vmul.f32 %v690, %v730
    %v744 = vmul.f32 %v694, %v730
    %v745 = vmul.f32 %v698, %v730
    %v746 = vmul.f32 %v702, %v730
    %v747 = vmul.f32 %v706, %v730
    %v748 = vmul.f32 %v710, %v730
    %v749 = vsel %vm51, %v733, -inf
    %v750 = vrot.slane %v749, 4
    %v751 = vmax.f32 %v749, %v750
    %v752 = vrot.slane %v751, 2
    %v753 = vmax.f32 %v751, %v752
    %v754 = vrot.slane %v753, 1
    %v755 = vmax.f32 %v753, %v754
    %v756 = vsel %vm51, %v734, -inf
    %v757 = vrot.slane %v756, 4
    %v758 = vmax.f32 %v756, %v757
    %v759 = vrot.slane %v758, 2
    %v760 = vmax.f32 %v758, %v759
    %v761 = vrot.slane %v760, 1
    %v762 = vmax.f32 %v760, %v761
    %v763 = vsel %vm51, %v735, -inf
    %v764 = vrot.slane %v763, 4
    %v765 = vmax.f32 %v763, %v764
    %v766 = vrot.slane %v765, 2
    %v767 = vmax.f32 %v765, %v766
    %v768 = vrot.slane %v767, 1
    %v769 = vmax.f32 %v767, %v768
    %v770 = vsel %vm51, %v736, -inf
    %v771 = vrot.slane %v770, 4
    %v772 = vmax.f32 %v770, %v771
    %v773 = vrot.slane %v772, 2
    %v774 = vmax.f32 %v772, %v773
    %v775 = vrot.slane %v774, 1
    %v776 = vmax.f32 %v774, %v775
    %v777 = vsel %vm51, %v737, -inf
    %v778 = vrot.slane %v777, 4
    %v779 = vmax.f32 %v777, %v778
    %v780 = vrot.slane %v779, 2
    %v781 = vmax.f32 %v779, %v780
    %v782 = vrot.slane %v781, 1
    %v783 = vmax.f32 %v781, %v782
    %v784 = vsel %vm51, %v738, -inf
    %v785 = vrot.slane %v784, 4
    %v786 = vmax.f32 %v784, %v785
    %v787 = vrot.slane %v786, 2
    %v788 = vmax.f32 %v786, %v787
    %v789 = vrot.slane %v788, 1
    %v790 = vmax.f32 %v788, %v789
    %v791 = vsel %vm51, %v739, -inf
    %v792 = vrot.slane %v791, 4
    %v793 = vmax.f32 %v791, %v792
    %v794 = vrot.slane %v793, 2
    %v795 = vmax.f32 %v793, %v794
    %v796 = vrot.slane %v795, 1
    %v797 = vmax.f32 %v795, %v796
    %v798 = vsel %vm51, %v740, -inf
    %v799 = vrot.slane %v798, 4
    %v800 = vmax.f32 %v798, %v799
    %v801 = vrot.slane %v800, 2
    %v802 = vmax.f32 %v800, %v801
    %v803 = vrot.slane %v802, 1
    %v804 = vmax.f32 %v802, %v803
    %v805 = vsel %vm51, %v741, -inf
    %v806 = vrot.slane %v805, 4
    %v807 = vmax.f32 %v805, %v806
    %v808 = vrot.slane %v807, 2
    %v809 = vmax.f32 %v807, %v808
    %v810 = vrot.slane %v809, 1
    %v811 = vmax.f32 %v809, %v810
    %v812 = vsel %vm51, %v742, -inf
    %v813 = vrot.slane %v812, 4
    %v814 = vmax.f32 %v812, %v813
    %v815 = vrot.slane %v814, 2
    %v816 = vmax.f32 %v814, %v815
    %v817 = vrot.slane %v816, 1
    %v818 = vmax.f32 %v816, %v817
    %v819 = vsel %vm51, %v743, -inf
    %v820 = vrot.slane %v819, 4
    %v821 = vmax.f32 %v819, %v820
    %v822 = vrot.slane %v821, 2
    %v823 = vmax.f32 %v821, %v822
    %v824 = vrot.slane %v823, 1
    %v825 = vmax.f32 %v823, %v824
    %v826 = vsel %vm51, %v744, -inf
    %v827 = vrot.slane %v826, 4
    %v828 = vmax.f32 %v826, %v827
    %v829 = vrot.slane %v828, 2
    %v830 = vmax.f32 %v828, %v829
    %v831 = vrot.slane %v830, 1
    %v832 = vmax.f32 %v830, %v831
    %v833 = vsel %vm51, %v745, -inf
    %v834 = vrot.slane %v833, 4
    %v835 = vmax.f32 %v833, %v834
    %v836 = vrot.slane %v835, 2
    %v837 = vmax.f32 %v835, %v836
    %v838 = vrot.slane %v837, 1
    %v839 = vmax.f32 %v837, %v838
    %v840 = vsel %vm51, %v746, -inf
    %v841 = vrot.slane %v840, 4
    %v842 = vmax.f32 %v840, %v841
    %v843 = vrot.slane %v842, 2
    %v844 = vmax.f32 %v842, %v843
    %v845 = vrot.slane %v844, 1
    %v846 = vmax.f32 %v844, %v845
    %v847 = vsel %vm51, %v747, -inf
    %v848 = vrot.slane %v847, 4
    %v849 = vmax.f32 %v847, %v848
    %v850 = vrot.slane %v849, 2
    %v851 = vmax.f32 %v849, %v850
    %v852 = vrot.slane %v851, 1
    %v853 = vmax.f32 %v851, %v852
    %v854 = vsel %vm51, %v748, -inf
    %v855 = vrot.slane %v854, 4
    %v856 = vmax.f32 %v854, %v855
    %v857 = vrot.slane %v856, 2
    %v858 = vmax.f32 %v856, %v857
    %v859 = vrot.slane %v858, 1
    %v860 = vmax.f32 %v858, %v859
    %v861 = vsub.f32 %v733, %v755
    %v862 = vsub.f32 %v734, %v762
    %v863 = vsub.f32 %v735, %v769
    %v864 = vsub.f32 %v736, %v776
    %v865 = vsub.f32 %v737, %v783
    %v866 = vsub.f32 %v738, %v790
    %v867 = vsub.f32 %v739, %v797
    %v868 = vsub.f32 %v740, %v804
    %v869 = vsub.f32 %v741, %v811
    %v870 = vsub.f32 %v742, %v818
    %v871 = vsub.f32 %v743, %v825
    %v872 = vsub.f32 %v744, %v832
    %v873 = vsub.f32 %v745, %v839
    %v874 = vsub.f32 %v746, %v846
    %v875 = vsub.f32 %v747, %v853
    %v876 = vsub.f32 %v748, %v860
    %v877 = vmul.f32 %v861, 1.442695
    %v878 = vpow.pop %v877
    %v879 = vmul.f32 %v862, 1.442695
    %v880 = vpow.pop %v879
    %v881 = vmul.f32 %v863, 1.442695
    %v882 = vpow.pop %v881
    %v883 = vmul.f32 %v864, 1.442695
    %v884 = vpow.pop %v883
    %v885 = vmul.f32 %v865, 1.442695
    %v886 = vpow.pop %v885
    %v887 = vmul.f32 %v866, 1.442695
    %v888 = vpow.pop %v887
    %v889 = vmul.f32 %v867, 1.442695
    %v890 = vpow.pop %v889
    %v891 = vmul.f32 %v868, 1.442695
    %v892 = vpow.pop %v891
    %v893 = vmul.f32 %v869, 1.442695
    %v894 = vpow.pop %v893
    %v895 = vmul.f32 %v870, 1.442695
    %v896 = vpow.pop %v895
    %v897 = vmul.f32 %v871, 1.442695
    %v898 = vpow.pop %v897
    %v899 = vmul.f32 %v872, 1.442695
    %v900 = vpow.pop %v899
    %v901 = vmul.f32 %v873, 1.442695
    %v902 = vpow.pop %v901
    %v903 = vmul.f32 %v874, 1.442695
    %v904 = vpow.pop %v903
    %v905 = vmul.f32 %v875, 1.442695
    %v906 = vpow.pop %v905
    %v907 = vmul.f32 %v876, 1.442695
    %v908 = vpow.pop %v907
    %v909 = vsel %vm51, %v878, 0.0
    %v910 = vrot.slane %v909, 4
    %v911 = vadd.f32 %v909, %v910
    %v912 = vrot.slane %v911, 2
    %v913 = vadd.f32 %v911, %v912
    %v914 = vrot.slane %v913, 1
    %v915 = vadd.f32 %v913, %v914
    %v916 = vsel %vm51, %v880, 0.0
    %v917 = vrot.slane %v916, 4
    %v918 = vadd.f32 %v916, %v917
    %v919 = vrot.slane %v918, 2
    %v920 = vadd.f32 %v918, %v919
    %v921 = vrot.slane %v920, 1
    %v922 = vadd.f32 %v920, %v921
    %v923 = vsel %vm51, %v882, 0.0
    %v924 = vrot.slane %v923, 4
    %v925 = vadd.f32 %v923, %v924
    %v926 = vrot.slane %v925, 2
    %v927 = vadd.f32 %v925, %v926
    %v928 = vrot.slane %v927, 1
    %v929 = vadd.f32 %v927, %v928
    %v930 = vsel %vm51, %v884, 0.0
    %v931 = vrot.slane %v930, 4
    %v932 = vadd.f32 %v930, %v931
    %v933 = vrot.slane %v932, 2
    %v934 = vadd.f32 %v932, %v933
    %v935 = vrot.slane %v934, 1
    %v936 = vadd.f32 %v934, %v935
    %v937 = vsel %vm51, %v886, 0.0
    %v938 = vrot.slane %v937, 4
    %v939 = vadd.f32 %v937, %v938
    %v940 = vrot.slane %v939, 2
    %v941 = vadd.f32 %v939, %v940
    %v942 = vrot.slane %v941, 1
    %v943 = vadd.f32 %v941, %v942
    %v944 = vsel %vm51, %v888, 0.0
    %v945 = vrot.slane %v944, 4
    %v946 = vadd.f32 %v944, %v945
    %v947 = vrot.slane %v946, 2
    %v948 = vadd.f32 %v946, %v947
    %v949 = vrot.slane %v948, 1
    %v950 = vadd.f32 %v948, %v949
    %v951 = vsel %vm51, %v890, 0.0
    %v952 = vrot.slane %v951, 4
    %v953 = vadd.f32 %v951, %v952
    %v954 = vrot.slane %v953, 2
    %v955 = vadd.f32 %v953, %v954
    %v956 = vrot.slane %v955, 1
    %v957 = vadd.f32 %v955, %v956
    %v958 = vsel %vm51, %v892, 0.0
    %v959 = vrot.slane %v958, 4
    %v960 = vadd.f32 %v958, %v959
    %v961 = vrot.slane %v960, 2
    %v962 = vadd.f32 %v960, %v961
    %v963 = vrot.slane %v962, 1
    %v964 = vadd.f32 %v962, %v963
    %v965 = vsel %vm51, %v894, 0.0
    %v966 = vrot.slane %v965, 4
    %v967 = vadd.f32 %v965, %v966
    %v968 = vrot.slane %v967, 2
    %v969 = vadd.f32 %v967, %v968
    %v970 = vrot.slane %v969, 1
    %v971 = vadd.f32 %v969, %v970
    %v972 = vsel %vm51, %v896, 0.0
    %v973 = vrot.slane %v972, 4
    %v974 = vadd.f32 %v972, %v973
    %v975 = vrot.slane %v974, 2
    %v976 = vadd.f32 %v974, %v975
    %v977 = vrot.slane %v976, 1
    %v978 = vadd.f32 %v976, %v977
    %v979 = vsel %vm51, %v898, 0.0
    %v980 = vrot.slane %v979, 4
    %v981 = vadd.f32 %v979, %v980
    %v982 = vrot.slane %v981, 2
    %v983 = vadd.f32 %v981, %v982
    %v984 = vrot.slane %v983, 1
    %v985 = vadd.f32 %v983, %v984
    %v986 = vsel %vm51, %v900, 0.0
    %v987 = vrot.slane %v986, 4
    %v988 = vadd.f32 %v986, %v987
    %v989 = vrot.slane %v988, 2
    %v990 = vadd.f32 %v988, %v989
    %v991 = vrot.slane %v990, 1
    %v992 = vadd.f32 %v990, %v991
    %v993 = vsel %vm51, %v902, 0.0
    %v994 = vrot.slane %v993, 4
    %v995 = vadd.f32 %v993, %v994
    %v996 = vrot.slane %v995, 2
    %v997 = vadd.f32 %v995, %v996
    %v998 = vrot.slane %v997, 1
    %v999 = vadd.f32 %v997, %v998
    %v1000 = vsel %vm51, %v904, 0.0
    %v1001 = vrot.slane %v1000, 4
    %v1002 = vadd.f32 %v1000, %v1001
    %v1003 = vrot.slane %v1002, 2
    %v1004 = vadd.f32 %v1002, %v1003
    %v1005 = vrot.slane %v1004, 1
    %v1006 = vadd.f32 %v1004, %v1005
    %v1007 = vsel %vm51, %v906, 0.0
    %v1008 = vrot.slane %v1007, 4
    %v1009 = vadd.f32 %v1007, %v1008
    %v1010 = vrot.slane %v1009, 2
    %v1011 = vadd.f32 %v1009, %v1010
    %v1012 = vrot.slane %v1011, 1
    %v1013 = vadd.f32 %v1011, %v1012
    %v1014 = vsel %vm51, %v908, 0.0
    %v1015 = vrot.slane %v1014, 4
    %v1016 = vadd.f32 %v1014, %v1015
    %v1017 = vrot.slane %v1016, 2
    %v1018 = vadd.f32 %v1016, %v1017
    %v1019 = vrot.slane %v1018, 1
    %v1020 = vadd.f32 %v1018, %v1019
    %v1021 = vrcp.pop %v915
    %v1022 = vrcp.pop %v922
    %v1023 = vrcp.pop %v929
    %v1024 = vrcp.pop %v936
    %v1025 = vrcp.pop %v943
    %v1026 = vrcp.pop %v950
    %v1027 = vrcp.pop %v957
    %v1028 = vrcp.pop %v964
    %v1029 = vrcp.pop %v971
    %v1030 = vrcp.pop %v978
    %v1031 = vrcp.pop %v985
    %v1032 = vrcp.pop %v992
    %v1033 = vrcp.pop %v999
    %v1034 = vrcp.pop %v1006
    %v1035 = vrcp.pop %v1013
    %v1036 = vrcp.pop %v1020
    %v1037 = vmul.f32 %v878, %v1021
    %v1038 = vmul.f32 %v880, %v1022
    %v1039 = vmul.f32 %v882, %v1023
    %v1040 = vmul.f32 %v884, %v1024
    %v1041 = vmul.f32 %v886, %v1025
    %v1042 = vmul.f32 %v888, %v1026
    %v1043 = vmul.f32 %v890, %v1027
    %v1044 = vmul.f32 %v892, %v1028
    %v1045 = vmul.f32 %v894, %v1029
    %v1046 = vmul.f32 %v896, %v1030
    %v1047 = vmul.f32 %v898, %v1031
    %v1048 = vmul.f32 %v900, %v1032
    %v1049 = vmul.f32 %v902, %v1033
    %v1050 = vmul.f32 %v904, %v1034
    %v1051 = vmul.f32 %v906, %v1035
    %v1052 = vmul.f32 %v908, %v1036
    %1053 = vrot.lane.b32.xlu0 %v538, 112
    %v1054 = vpop.permute.xlu0 %1053
    %1055 = vrot.lane.b32.xlu0 %v544, 112
    %v1056 = vpop.permute.xlu0 %1055
    %v1059 = vmul.f32 %v1037, %v1054
    %v1060 = vmul.f32 %v1038, %v1054
    %v1061 = vmul.f32 %v1039, %v1054
    %v1062 = vmul.f32 %v1040, %v1054
    %v1063 = vmul.f32 %v1041, %v1054
    %v1064 = vmul.f32 %v1042, %v1054
    %v1065 = vmul.f32 %v1043, %v1054
    %v1066 = vmul.f32 %v1044, %v1054
    %v1067 = vmul.f32 %v1045, %v1056
    %v1068 = vmul.f32 %v1046, %v1056
    %v1069 = vmul.f32 %v1047, %v1056
    %v1070 = vmul.f32 %v1048, %v1056
    %v1071 = vmul.f32 %v1049, %v1056
    %v1072 = vmul.f32 %v1050, %v1056
    %v1073 = vmul.f32 %v1051, %v1056
    %v1074 = vmul.f32 %v1052, %v1056
    %v1075 = vsel %vm51, %v1059, 0.0
    %v1076 = vrot.slane %v1075, 4
    %v1077 = vadd.f32 %v1075, %v1076
    %v1078 = vrot.slane %v1077, 2
    %v1079 = vadd.f32 %v1077, %v1078
    %v1080 = vrot.slane %v1079, 1
    %v1081 = vadd.f32 %v1079, %v1080
    %v1082 = vsel %vm51, %v1060, 0.0
    %v1083 = vrot.slane %v1082, 4
    %v1084 = vadd.f32 %v1082, %v1083
    %v1085 = vrot.slane %v1084, 2
    %v1086 = vadd.f32 %v1084, %v1085
    %v1087 = vrot.slane %v1086, 1
    %v1088 = vadd.f32 %v1086, %v1087
    %v1089 = vsel %vm51, %v1061, 0.0
    %v1090 = vrot.slane %v1089, 4
    %v1091 = vadd.f32 %v1089, %v1090
    %v1092 = vrot.slane %v1091, 2
    %v1093 = vadd.f32 %v1091, %v1092
    %v1094 = vrot.slane %v1093, 1
    %v1095 = vadd.f32 %v1093, %v1094
    %v1096 = vsel %vm51, %v1062, 0.0
    %v1097 = vrot.slane %v1096, 4
    %v1098 = vadd.f32 %v1096, %v1097
    %v1099 = vrot.slane %v1098, 2
    %v1100 = vadd.f32 %v1098, %v1099
    %v1101 = vrot.slane %v1100, 1
    %v1102 = vadd.f32 %v1100, %v1101
    %v1103 = vsel %vm51, %v1063, 0.0
    %v1104 = vrot.slane %v1103, 4
    %v1105 = vadd.f32 %v1103, %v1104
    %v1106 = vrot.slane %v1105, 2
    %v1107 = vadd.f32 %v1105, %v1106
    %v1108 = vrot.slane %v1107, 1
    %v1109 = vadd.f32 %v1107, %v1108
    %v1110 = vsel %vm51, %v1064, 0.0
    %v1111 = vrot.slane %v1110, 4
    %v1112 = vadd.f32 %v1110, %v1111
    %v1113 = vrot.slane %v1112, 2
    %v1114 = vadd.f32 %v1112, %v1113
    %v1115 = vrot.slane %v1114, 1
    %v1116 = vadd.f32 %v1114, %v1115
    %v1117 = vsel %vm51, %v1065, 0.0
    %v1118 = vrot.slane %v1117, 4
    %v1119 = vadd.f32 %v1117, %v1118
    %v1120 = vrot.slane %v1119, 2
    %v1121 = vadd.f32 %v1119, %v1120
    %v1122 = vrot.slane %v1121, 1
    %v1123 = vadd.f32 %v1121, %v1122
    %v1124 = vsel %vm51, %v1066, 0.0
    %v1125 = vrot.slane %v1124, 4
    %v1126 = vadd.f32 %v1124, %v1125
    %v1127 = vrot.slane %v1126, 2
    %v1128 = vadd.f32 %v1126, %v1127
    %v1129 = vrot.slane %v1128, 1
    %v1130 = vadd.f32 %v1128, %v1129
    %v1131 = vsel %vm51, %v1067, 0.0
    %v1132 = vrot.slane %v1131, 4
    %v1133 = vadd.f32 %v1131, %v1132
    %v1134 = vrot.slane %v1133, 2
    %v1135 = vadd.f32 %v1133, %v1134
    %v1136 = vrot.slane %v1135, 1
    %v1137 = vadd.f32 %v1135, %v1136
    %v1138 = vsel %vm51, %v1068, 0.0
    %v1139 = vrot.slane %v1138, 4
    %v1140 = vadd.f32 %v1138, %v1139
    %v1141 = vrot.slane %v1140, 2
    %v1142 = vadd.f32 %v1140, %v1141
    %v1143 = vrot.slane %v1142, 1
    %v1144 = vadd.f32 %v1142, %v1143
    %v1145 = vsel %vm51, %v1069, 0.0
    %v1146 = vrot.slane %v1145, 4
    %v1147 = vadd.f32 %v1145, %v1146
    %v1148 = vrot.slane %v1147, 2
    %v1149 = vadd.f32 %v1147, %v1148
    %v1150 = vrot.slane %v1149, 1
    %v1151 = vadd.f32 %v1149, %v1150
    %v1152 = vsel %vm51, %v1070, 0.0
    %v1153 = vrot.slane %v1152, 4
    %v1154 = vadd.f32 %v1152, %v1153
    %v1155 = vrot.slane %v1154, 2
    %v1156 = vadd.f32 %v1154, %v1155
    %v1157 = vrot.slane %v1156, 1
    %v1158 = vadd.f32 %v1156, %v1157
    %v1159 = vsel %vm51, %v1071, 0.0
    %v1160 = vrot.slane %v1159, 4
    %v1161 = vadd.f32 %v1159, %v1160
    %v1162 = vrot.slane %v1161, 2
    %v1163 = vadd.f32 %v1161, %v1162
    %v1164 = vrot.slane %v1163, 1
    %v1165 = vadd.f32 %v1163, %v1164
    %v1166 = vsel %vm51, %v1072, 0.0
    %v1167 = vrot.slane %v1166, 4
    %v1168 = vadd.f32 %v1166, %v1167
    %v1169 = vrot.slane %v1168, 2
    %v1170 = vadd.f32 %v1168, %v1169
    %v1171 = vrot.slane %v1170, 1
    %v1172 = vadd.f32 %v1170, %v1171
    %v1173 = vsel %vm51, %v1073, 0.0
    %v1174 = vrot.slane %v1173, 4
    %v1175 = vadd.f32 %v1173, %v1174
    %v1176 = vrot.slane %v1175, 2
    %v1177 = vadd.f32 %v1175, %v1176
    %v1178 = vrot.slane %v1177, 1
    %v1179 = vadd.f32 %v1177, %v1178
    %v1180 = vsel %vm51, %v1074, 0.0
    %v1181 = vrot.slane %v1180, 4
    %v1182 = vadd.f32 %v1180, %v1181
    %v1183 = vrot.slane %v1182, 2
    %v1184 = vadd.f32 %v1182, %v1183
    %v1185 = vrot.slane %v1184, 1
    %v1186 = vadd.f32 %v1184, %v1185
    %vm1203 = vcmask 1041409
    %v1204 = vsel %vm1203, %v1088, %v1081
    %vm1205 = vcmask 1042434
    %v1206 = vsel %vm1205, %v1095, %v1204
    %vm1207 = vcmask 1043459
    %v1208 = vsel %vm1207, %v1102, %v1206
    %vm1209 = vcmask 1044484
    %v1210 = vsel %vm1209, %v1109, %v1208
    %vm1211 = vcmask 1045509
    %v1212 = vsel %vm1211, %v1116, %v1210
    %vm1213 = vcmask 1046534
    %v1214 = vsel %vm1213, %v1123, %v1212
    %vm1215 = vcmask 1047559
    %v1216 = vsel %vm1215, %v1130, %v1214
    %v1217 = vsel %vm1203, %v1144, %v1137
    %v1218 = vsel %vm1205, %v1151, %v1217
    %v1219 = vsel %vm1207, %v1158, %v1218
    %v1220 = vsel %vm1209, %v1165, %v1219
    %v1221 = vsel %vm1211, %v1172, %v1220
    %v1222 = vsel %vm1213, %v1179, %v1221
    %v1223 = vsel %vm1215, %v1186, %v1222
    %1225 = vrot.lane.b32.xlu0 %v43, 104
    %v1226 = vpop.permute.xlu0 %1225
    %1229 = vrot.lane.b32.xlu0 %v50, 104
    %v1230 = vpop.permute.xlu0 %1229
    %v1232 = vsel %vm51, %v1216, 0
    %v1234 = vsel %vm51, %v1223, 0
    %1236 = vmatprep.subr.mxu0 0.0
    %v1237 = vand.u32 %v1226, 4294901760
    %1238 = vmatpush1.msra.mxu0 %v1237
    %1239 = vmatprep.subr.mxu0 0.0
    %1240 = vmatpush1.msra.mxu0 0.0
    %1241 = vmatprep.subr.mxu0 0.0
    %1242 = vmatpush1.msra.mxu0 0.0
    %1243 = vmatprep.subr.mxu0 0.0
    %1244 = vmatpush1.msra.mxu0 0.0
    %1245 = vmatprep.subr.mxu0 0.0
    %1246 = vmatpush1.msra.mxu0 0.0
    %1247 = vmatprep.subr.mxu0 0.0
    %1248 = vmatpush1.msra.mxu0 0.0
    %1249 = vmatprep.subr.mxu0 0.0
    %1250 = vmatpush1.msra.mxu0 0.0
    %1251 = vmatprep.subr.mxu0 0.0
    %1252 = vmatpush1.msra.mxu0 0.0
    %1253 = vmatprep.subr.mxu0 0.0
    %1254 = vmatpush1.msra.mxu0 0.0
    %1255 = vmatprep.subr.mxu0 0.0
    %1256 = vmatpush1.msra.mxu0 0.0
    %1257 = vmatprep.subr.mxu0 0.0
    %1258 = vmatpush1.msra.mxu0 0.0
    %1259 = vmatprep.subr.mxu0 0.0
    %1260 = vmatpush1.msra.mxu0 0.0
    %1261 = vmatprep.subr.mxu0 0.0
    %1262 = vmatpush1.msra.mxu0 0.0
    %1263 = vmatprep.subr.mxu0 0.0
    %1264 = vmatpush1.msra.mxu0 0.0
    %1265 = vmatprep.subr.mxu0 0.0
    %1266 = vmatpush1.msra.mxu0 0.0
    %1267 = vmatprep.subr.mxu0 0.0
    %1268 = vmatpush1.msra.mxu0 0.0
    %1269 = vmatprep.subr.mxu0 0.0
    %1270 = vmatpush1.msra.mxu0 0.0
    %1271 = vmatprep.subr.mxu0 0.0
    %1272 = vmatpush1.msra.mxu0 0.0
    %1273 = vmatprep.subr.mxu0 0.0
    %1274 = vmatpush1.msra.mxu0 0.0
    %1275 = vmatprep.subr.mxu0 0.0
    %1276 = vmatpush1.msra.mxu0 0.0
    %1277 = vmatprep.subr.mxu0 0.0
    %1278 = vmatpush1.msra.mxu0 0.0
    %1279 = vmatprep.subr.mxu0 0.0
    %1280 = vmatpush1.msra.mxu0 0.0
    %1281 = vmatprep.subr.mxu0 0.0
    %1282 = vmatpush1.msra.mxu0 0.0
    %1283 = vmatprep.subr.mxu0 0.0
    %1284 = vmatpush1.msra.mxu0 0.0
    %1285 = vmatprep.subr.mxu0 0.0
    %1286 = vmatpush1.msra.mxu0 0.0
    %1287 = vmatprep.subr.mxu0 0.0
    %1288 = vmatpush1.msra.mxu0 0.0
    %1289 = vmatprep.subr.mxu0 0.0
    %1290 = vmatpush1.msra.mxu0 0.0
    %1291 = vmatprep.subr.mxu0 0.0
    %1292 = vmatpush1.msra.mxu0 0.0
    %1293 = vmatprep.subr.mxu0 0.0
    %1294 = vmatpush1.msra.mxu0 0.0
    %1295 = vmatprep.subr.mxu0 0.0
    %1296 = vmatpush1.msra.mxu0 0.0
    %1297 = vmatprep.subr.mxu0 0.0
    %1298 = vmatpush1.msra.mxu0 0.0
    %1299 = vmatprep.subr.mxu0 0.0
    %1300 = vmatpush1.msra.mxu0 0.0
    %1301 = vmatprep.mubr.f32.mxu0 0.0
    %v1302 = vand.u32 %v1232, 4294901760
    %v1303 = vsub.f32 %v1232, %v1302
    %v1304 = vand.u32 %v1303, 4294901760
    %v1305 = vsub.f32 %v1303, %v1304
    %v1306 = vand.u32 %v1305, 4294901760
    %1307 = vmatmul.mubr.f32.gmra.mrb[0].mxu0 %v1306
    %v1308 = vpop.f32.mrb[0].mxu0
    %v1309 = vadd.f32 %v1230, %v1308
    %v1310 = vpop.f32.mrb[0].mxu0
    %1311 = vmatprep.mubr.f32.mxu0 0.0
    %v1312 = vand.u32 %v1234, 4294901760
    %v1313 = vsub.f32 %v1234, %v1312
    %v1314 = vand.u32 %v1313, 4294901760
    %v1315 = vsub.f32 %v1313, %v1314
    %v1316 = vand.u32 %v1315, 4294901760
    %1317 = vmatmul.mubr.f32.gmra.mrb[0].mxu0 %v1316
    %v1318 = vpop.f32.mrb[0].mxu0
    %v1319 = vadd.f32 %v1230, %v1318
    %v1320 = vpop.f32.mrb[0].mxu0
    %1321 = vdwg.mxu0
    %1322 = vmatprep.subr.mxu0 0.0
    %v1323 = vand.u32 %v1226, 4294901760
    %v1324 = vsub.f32 %v1226, %v1323
    %v1325 = vand.u32 %v1324, 4294901760
    %v1326 = vsub.f32 %v1324, %v1325
    %v1327 = vand.u32 %v1326, 4294901760
    %1328 = vmatpush1.msra.mxu0 %v1327
    %1329 = vmatprep.subr.mxu0 0.0
    %1330 = vmatpush1.msra.mxu0 0.0
    %1331 = vmatprep.subr.mxu0 0.0
    %1332 = vmatpush1.msra.mxu0 0.0
    %1333 = vmatprep.subr.mxu0 0.0
    %1334 = vmatpush1.msra.mxu0 0.0
    %1335 = vmatprep.subr.mxu0 0.0
    %1336 = vmatpush1.msra.mxu0 0.0
    %1337 = vmatprep.subr.mxu0 0.0
    %1338 = vmatpush1.msra.mxu0 0.0
    %1339 = vmatprep.subr.mxu0 0.0
    %1340 = vmatpush1.msra.mxu0 0.0
    %1341 = vmatprep.subr.mxu0 0.0
    %1342 = vmatpush1.msra.mxu0 0.0
    %1343 = vmatprep.subr.mxu0 0.0
    %1344 = vmatpush1.msra.mxu0 0.0
    %1345 = vmatprep.subr.mxu0 0.0
    %1346 = vmatpush1.msra.mxu0 0.0
    %1347 = vmatprep.subr.mxu0 0.0
    %1348 = vmatpush1.msra.mxu0 0.0
    %1349 = vmatprep.subr.mxu0 0.0
    %1350 = vmatpush1.msra.mxu0 0.0
    %1351 = vmatprep.subr.mxu0 0.0
    %1352 = vmatpush1.msra.mxu0 0.0
    %1353 = vmatprep.subr.mxu0 0.0
    %1354 = vmatpush1.msra.mxu0 0.0
    %1355 = vmatprep.subr.mxu0 0.0
    %1356 = vmatpush1.msra.mxu0 0.0
    %1357 = vmatprep.subr.mxu0 0.0
    %1358 = vmatpush1.msra.mxu0 0.0
    %1359 = vmatprep.subr.mxu0 0.0
    %1360 = vmatpush1.msra.mxu0 0.0
    %1361 = vmatprep.subr.mxu0 0.0
    %1362 = vmatpush1.msra.mxu0 0.0
    %1363 = vmatprep.subr.mxu0 0.0
    %1364 = vmatpush1.msra.mxu0 0.0
    %1365 = vmatprep.subr.mxu0 0.0
    %1366 = vmatpush1.msra.mxu0 0.0
    %1367 = vmatprep.subr.mxu0 0.0
    %1368 = vmatpush1.msra.mxu0 0.0
    %1369 = vmatprep.subr.mxu0 0.0
    %1370 = vmatpush1.msra.mxu0 0.0
    %1371 = vmatprep.subr.mxu0 0.0
    %1372 = vmatpush1.msra.mxu0 0.0
    %1373 = vmatprep.subr.mxu0 0.0
    %1374 = vmatpush1.msra.mxu0 0.0
    %1375 = vmatprep.subr.mxu0 0.0
    %1376 = vmatpush1.msra.mxu0 0.0
    %1377 = vmatprep.subr.mxu0 0.0
    %1378 = vmatpush1.msra.mxu0 0.0
    %1379 = vmatprep.subr.mxu0 0.0
    %1380 = vmatpush1.msra.mxu0 0.0
    %1381 = vmatprep.subr.mxu0 0.0
    %1382 = vmatpush1.msra.mxu0 0.0
    %1383 = vmatprep.subr.mxu0 0.0
    %1384 = vmatpush1.msra.mxu0 0.0
    %1385 = vmatprep.subr.mxu0 0.0
    %1386 = vmatpush1.msra.mxu0 0.0
    %1387 = vmatprep.subr.mxu0 0.0
    %1388 = vmatpush1.msra.mxu0 0.0
    %1389 = vmatprep.subr.mxu0 0.0
    %1390 = vmatpush1.msra.mxu0 0.0
    %1391 = vmatprep.mubr.f32.mxu0 0.0
    %v1392 = vand.u32 %v1232, 4294901760
    %1393 = vmatmul.mubr.f32.gmra.mrb[0].mxu0 %v1392
    %v1394 = vpop.f32.mrb[0].mxu0
    %v1395 = vadd.f32 %v1309, %v1394
    %v1396 = vpop.f32.mrb[0].mxu0
    %1397 = vmatprep.mubr.f32.mxu0 0.0
    %v1398 = vand.u32 %v1234, 4294901760
    %1399 = vmatmul.mubr.f32.gmra.mrb[0].mxu0 %v1398
    %v1400 = vpop.f32.mrb[0].mxu0
    %v1401 = vadd.f32 %v1319, %v1400
    %v1402 = vpop.f32.mrb[0].mxu0
    %1403 = vdwg.mxu0
    %1404 = vmatprep.subr.mxu0 0.0
    %v1405 = vand.u32 %v1226, 4294901760
    %v1406 = vsub.f32 %v1226, %v1405
    %1407 = vmatpush1.msra.mxu0 %v1406
    %1408 = vmatprep.subr.mxu0 0.0
    %1409 = vmatpush1.msra.mxu0 0.0
    %1410 = vmatprep.subr.mxu0 0.0
    %1411 = vmatpush1.msra.mxu0 0.0
    %1412 = vmatprep.subr.mxu0 0.0
    %1413 = vmatpush1.msra.mxu0 0.0
    %1414 = vmatprep.subr.mxu0 0.0
    %1415 = vmatpush1.msra.mxu0 0.0
    %1416 = vmatprep.subr.mxu0 0.0
    %1417 = vmatpush1.msra.mxu0 0.0
    %1418 = vmatprep.subr.mxu0 0.0
    %1419 = vmatpush1.msra.mxu0 0.0
    %1420 = vmatprep.subr.mxu0 0.0
    %1421 = vmatpush1.msra.mxu0 0.0
    %1422 = vmatprep.subr.mxu0 0.0
    %1423 = vmatpush1.msra.mxu0 0.0
    %1424 = vmatprep.subr.mxu0 0.0
    %1425 = vmatpush1.msra.mxu0 0.0
    %1426 = vmatprep.subr.mxu0 0.0
    %1427 = vmatpush1.msra.mxu0 0.0
    %1428 = vmatprep.subr.mxu0 0.0
    %1429 = vmatpush1.msra.mxu0 0.0
    %1430 = vmatprep.subr.mxu0 0.0
    %1431 = vmatpush1.msra.mxu0 0.0
    %1432 = vmatprep.subr.mxu0 0.0
    %1433 = vmatpush1.msra.mxu0 0.0
    %1434 = vmatprep.subr.mxu0 0.0
    %1435 = vmatpush1.msra.mxu0 0.0
    %1436 = vmatprep.subr.mxu0 0.0
    %1437 = vmatpush1.msra.mxu0 0.0
    %1438 = vmatprep.subr.mxu0 0.0
    %1439 = vmatpush1.msra.mxu0 0.0
    %1440 = vmatprep.subr.mxu0 0.0
    %1441 = vmatpush1.msra.mxu0 0.0
    %1442 = vmatprep.subr.mxu0 0.0
    %1443 = vmatpush1.msra.mxu0 0.0
    %1444 = vmatprep.subr.mxu0 0.0
    %1445 = vmatpush1.msra.mxu0 0.0
    %1446 = vmatprep.subr.mxu0 0.0
    %1447 = vmatpush1.msra.mxu0 0.0
    %1448 = vmatprep.subr.mxu0 0.0
    %1449 = vmatpush1.msra.mxu0 0.0
    %1450 = vmatprep.subr.mxu0 0.0
    %1451 = vmatpush1.msra.mxu0 0.0
    %1452 = vmatprep.subr.mxu0 0.0
    %1453 = vmatpush1.msra.mxu0 0.0
    %1454 = vmatprep.subr.mxu0 0.0
    %1455 = vmatpush1.msra.mxu0 0.0
    %1456 = vmatprep.subr.mxu0 0.0
    %1457 = vmatpush1.msra.mxu0 0.0
    %1458 = vmatprep.subr.mxu0 0.0
    %1459 = vmatpush1.msra.mxu0 0.0
    %1460 = vmatprep.subr.mxu0 0.0
    %1461 = vmatpush1.msra.mxu0 0.0
    %1462 = vmatprep.subr.mxu0 0.0
    %1463 = vmatpush1.msra.mxu0 0.0
    %1464 = vmatprep.subr.mxu0 0.0
    %1465 = vmatpush1.msra.mxu0 0.0
    %1466 = vmatprep.subr.mxu0 0.0
    %1467 = vmatpush1.msra.mxu0 0.0
    %1468 = vmatprep.subr.mxu0 0.0
    %1469 = vmatpush1.msra.mxu0 0.0
    %1470 = vmatprep.mubr.f32.mxu0 0.0
    %v1471 = vand.u32 %v1232, 4294901760
    %v1472 = vsub.f32 %v1232, %v1471
    %1473 = vmatmul.mubr.f32.gmra.mrb[0].mxu0 %v1472
    %v1474 = vpop.f32.mrb[0].mxu0
    %v1475 = vadd.f32 %v1395, %v1474
    %v1476 = vpop.f32.mrb[0].mxu0
    %1477 = vmatprep.mubr.f32.mxu0 0.0
    %v1478 = vand.u32 %v1234, 4294901760
    %v1479 = vsub.f32 %v1234, %v1478
    %1480 = vmatmul.mubr.f32.gmra.mrb[0].mxu0 %v1479
    %v1481 = vpop.f32.mrb[0].mxu0
    %v1482 = vadd.f32 %v1401, %v1481
    %v1483 = vpop.f32.mrb[0].mxu0
    %1484 = vdwg.mxu0
    %1485 = vmatprep.subr.mxu0 0.0
    %v1486 = vand.u32 %v1226, 4294901760
    %1487 = vmatpush1.msra.mxu0 %v1486
    %1488 = vmatprep.subr.mxu0 0.0
    %1489 = vmatpush1.msra.mxu0 0.0
    %1490 = vmatprep.subr.mxu0 0.0
    %1491 = vmatpush1.msra.mxu0 0.0
    %1492 = vmatprep.subr.mxu0 0.0
    %1493 = vmatpush1.msra.mxu0 0.0
    %1494 = vmatprep.subr.mxu0 0.0
    %1495 = vmatpush1.msra.mxu0 0.0
    %1496 = vmatprep.subr.mxu0 0.0
    %1497 = vmatpush1.msra.mxu0 0.0
    %1498 = vmatprep.subr.mxu0 0.0
    %1499 = vmatpush1.msra.mxu0 0.0
    %1500 = vmatprep.subr.mxu0 0.0
    %1501 = vmatpush1.msra.mxu0 0.0
    %1502 = vmatprep.subr.mxu0 0.0
    %1503 = vmatpush1.msra.mxu0 0.0
    %1504 = vmatprep.subr.mxu0 0.0
    %1505 = vmatpush1.msra.mxu0 0.0
    %1506 = vmatprep.subr.mxu0 0.0
    %1507 = vmatpush1.msra.mxu0 0.0
    %1508 = vmatprep.subr.mxu0 0.0
    %1509 = vmatpush1.msra.mxu0 0.0
    %1510 = vmatprep.subr.mxu0 0.0
    %1511 = vmatpush1.msra.mxu0 0.0
    %1512 = vmatprep.subr.mxu0 0.0
    %1513 = vmatpush1.msra.mxu0 0.0
    %1514 = vmatprep.subr.mxu0 0.0
    %1515 = vmatpush1.msra.mxu0 0.0
    %1516 = vmatprep.subr.mxu0 0.0
    %1517 = vmatpush1.msra.mxu0 0.0
    %1518 = vmatprep.subr.mxu0 0.0
    %1519 = vmatpush1.msra.mxu0 0.0
    %1520 = vmatprep.subr.mxu0 0.0
    %1521 = vmatpush1.msra.mxu0 0.0
    %1522 = vmatprep.subr.mxu0 0.0
    %1523 = vmatpush1.msra.mxu0 0.0
    %1524 = vmatprep.subr.mxu0 0.0
    %1525 = vmatpush1.msra.mxu0 0.0
    %1526 = vmatprep.subr.mxu0 0.0
    %1527 = vmatpush1.msra.mxu0 0.0
    %1528 = vmatprep.subr.mxu0 0.0
    %1529 = vmatpush1.msra.mxu0 0.0
    %1530 = vmatprep.subr.mxu0 0.0
    %1531 = vmatpush1.msra.mxu0 0.0
    %1532 = vmatprep.subr.mxu0 0.0
    %1533 = vmatpush1.msra.mxu0 0.0
    %1534 = vmatprep.subr.mxu0 0.0
    %1535 = vmatpush1.msra.mxu0 0.0
    %1536 = vmatprep.subr.mxu0 0.0
    %1537 = vmatpush1.msra.mxu0 0.0
    %1538 = vmatprep.subr.mxu0 0.0
    %1539 = vmatpush1.msra.mxu0 0.0
    %1540 = vmatprep.subr.mxu0 0.0
    %1541 = vmatpush1.msra.mxu0 0.0
    %1542 = vmatprep.subr.mxu0 0.0
    %1543 = vmatpush1.msra.mxu0 0.0
    %1544 = vmatprep.subr.mxu0 0.0
    %1545 = vmatpush1.msra.mxu0 0.0
    %1546 = vmatprep.subr.mxu0 0.0
    %1547 = vmatpush1.msra.mxu0 0.0
    %1548 = vmatprep.subr.mxu0 0.0
    %1549 = vmatpush1.msra.mxu0 0.0
    %1550 = vmatprep.mubr.f32.mxu0 0.0
    %v1551 = vand.u32 %v1232, 4294901760
    %v1552 = vsub.f32 %v1232, %v1551
    %v1553 = vand.u32 %v1552, 4294901760
    %1554 = vmatmul.mubr.f32.gmra.mrb[0].mxu0 %v1553
    %v1555 = vpop.f32.mrb[0].mxu0
    %v1556 = vadd.f32 %v1475, %v1555
    %v1557 = vpop.f32.mrb[0].mxu0
    %1558 = vmatprep.mubr.f32.mxu0 0.0
    %v1559 = vand.u32 %v1234, 4294901760
    %v1560 = vsub.f32 %v1234, %v1559
    %v1561 = vand.u32 %v1560, 4294901760
    %1562 = vmatmul.mubr.f32.gmra.mrb[0].mxu0 %v1561
    %v1563 = vpop.f32.mrb[0].mxu0
    %v1564 = vadd.f32 %v1482, %v1563
    %v1565 = vpop.f32.mrb[0].mxu0
    %1566 = vdwg.mxu0
    %1567 = vmatprep.subr.mxu0 0.0
    %v1568 = vand.u32 %v1226, 4294901760
    %v1569 = vsub.f32 %v1226, %v1568
    %v1570 = vand.u32 %v1569, 4294901760
    %1571 = vmatpush1.msra.mxu0 %v1570
    %1572 = vmatprep.subr.mxu0 0.0
    %1573 = vmatpush1.msra.mxu0 0.0
    %1574 = vmatprep.subr.mxu0 0.0
    %1575 = vmatpush1.msra.mxu0 0.0
    %1576 = vmatprep.subr.mxu0 0.0
    %1577 = vmatpush1.msra.mxu0 0.0
    %1578 = vmatprep.subr.mxu0 0.0
    %1579 = vmatpush1.msra.mxu0 0.0
    %1580 = vmatprep.subr.mxu0 0.0
    %1581 = vmatpush1.msra.mxu0 0.0
    %1582 = vmatprep.subr.mxu0 0.0
    %1583 = vmatpush1.msra.mxu0 0.0
    %1584 = vmatprep.subr.mxu0 0.0
    %1585 = vmatpush1.msra.mxu0 0.0
    %1586 = vmatprep.subr.mxu0 0.0
    %1587 = vmatpush1.msra.mxu0 0.0
    %1588 = vmatprep.subr.mxu0 0.0
    %1589 = vmatpush1.msra.mxu0 0.0
    %1590 = vmatprep.subr.mxu0 0.0
    %1591 = vmatpush1.msra.mxu0 0.0
    %1592 = vmatprep.subr.mxu0 0.0
    %1593 = vmatpush1.msra.mxu0 0.0
    %1594 = vmatprep.subr.mxu0 0.0
    %1595 = vmatpush1.msra.mxu0 0.0
    %1596 = vmatprep.subr.mxu0 0.0
    %1597 = vmatpush1.msra.mxu0 0.0
    %1598 = vmatprep.subr.mxu0 0.0
    %1599 = vmatpush1.msra.mxu0 0.0
    %1600 = vmatprep.subr.mxu0 0.0
    %1601 = vmatpush1.msra.mxu0 0.0
    %1602 = vmatprep.subr.mxu0 0.0
    %1603 = vmatpush1.msra.mxu0 0.0
    %1604 = vmatprep.subr.mxu0 0.0
    %1605 = vmatpush1.msra.mxu0 0.0
    %1606 = vmatprep.subr.mxu0 0.0
    %1607 = vmatpush1.msra.mxu0 0.0
    %1608 = vmatprep.subr.mxu0 0.0
    %1609 = vmatpush1.msra.mxu0 0.0
    %1610 = vmatprep.subr.mxu0 0.0
    %1611 = vmatpush1.msra.mxu0 0.0
    %1612 = vmatprep.subr.mxu0 0.0
    %1613 = vmatpush1.msra.mxu0 0.0
    %1614 = vmatprep.subr.mxu0 0.0
    %1615 = vmatpush1.msra.mxu0 0.0
    %1616 = vmatprep.subr.mxu0 0.0
    %1617 = vmatpush1.msra.mxu0 0.0
    %1618 = vmatprep.subr.mxu0 0.0
    %1619 = vmatpush1.msra.mxu0 0.0
    %1620 = vmatprep.subr.mxu0 0.0
    %1621 = vmatpush1.msra.mxu0 0.0
    %1622 = vmatprep.subr.mxu0 0.0
    %1623 = vmatpush1.msra.mxu0 0.0
    %1624 = vmatprep.subr.mxu0 0.0
    %1625 = vmatpush1.msra.mxu0 0.0
    %1626 = vmatprep.subr.mxu0 0.0
    %1627 = vmatpush1.msra.mxu0 0.0
    %1628 = vmatprep.subr.mxu0 0.0
    %1629 = vmatpush1.msra.mxu0 0.0
    %1630 = vmatprep.subr.mxu0 0.0
    %1631 = vmatpush1.msra.mxu0 0.0
    %1632 = vmatprep.subr.mxu0 0.0
    %1633 = vmatpush1.msra.mxu0 0.0
    %1634 = vmatprep.mubr.f32.mxu0 0.0
    %v1635 = vand.u32 %v1232, 4294901760
    %1636 = vmatmul.mubr.f32.gmra.mrb[0].mxu0 %v1635
    %v1637 = vpop.f32.mrb[0].mxu0
    %v1638 = vadd.f32 %v1556, %v1637
    %v1639 = vpop.f32.mrb[0].mxu0
    %1640 = vmatprep.mubr.f32.mxu0 0.0
    %v1641 = vand.u32 %v1234, 4294901760
    %1642 = vmatmul.mubr.f32.gmra.mrb[0].mxu0 %v1641
    %v1643 = vpop.f32.mrb[0].mxu0
    %v1644 = vadd.f32 %v1564, %v1643
    %v1645 = vpop.f32.mrb[0].mxu0
    %1646 = vdwg.mxu0
    %1647 = vmatprep.subr.mxu0 0.0
    %v1648 = vand.u32 %v1226, 4294901760
    %1649 = vmatpush1.msra.mxu0 %v1648
    %1650 = vmatprep.subr.mxu0 0.0
    %1651 = vmatpush1.msra.mxu0 0.0
    %1652 = vmatprep.subr.mxu0 0.0
    %1653 = vmatpush1.msra.mxu0 0.0
    %1654 = vmatprep.subr.mxu0 0.0
    %1655 = vmatpush1.msra.mxu0 0.0
    %1656 = vmatprep.subr.mxu0 0.0
    %1657 = vmatpush1.msra.mxu0 0.0
    %1658 = vmatprep.subr.mxu0 0.0
    %1659 = vmatpush1.msra.mxu0 0.0
    %1660 = vmatprep.subr.mxu0 0.0
    %1661 = vmatpush1.msra.mxu0 0.0
    %1662 = vmatprep.subr.mxu0 0.0
    %1663 = vmatpush1.msra.mxu0 0.0
    %1664 = vmatprep.subr.mxu0 0.0
    %1665 = vmatpush1.msra.mxu0 0.0
    %1666 = vmatprep.subr.mxu0 0.0
    %1667 = vmatpush1.msra.mxu0 0.0
    %1668 = vmatprep.subr.mxu0 0.0
    %1669 = vmatpush1.msra.mxu0 0.0
    %1670 = vmatprep.subr.mxu0 0.0
    %1671 = vmatpush1.msra.mxu0 0.0
    %1672 = vmatprep.subr.mxu0 0.0
    %1673 = vmatpush1.msra.mxu0 0.0
    %1674 = vmatprep.subr.mxu0 0.0
    %1675 = vmatpush1.msra.mxu0 0.0
    %1676 = vmatprep.subr.mxu0 0.0
    %1677 = vmatpush1.msra.mxu0 0.0
    %1678 = vmatprep.subr.mxu0 0.0
    %1679 = vmatpush1.msra.mxu0 0.0
    %1680 = vmatprep.subr.mxu0 0.0
    %1681 = vmatpush1.msra.mxu0 0.0
    %1682 = vmatprep.subr.mxu0 0.0
    %1683 = vmatpush1.msra.mxu0 0.0
    %1684 = vmatprep.subr.mxu0 0.0
    %1685 = vmatpush1.msra.mxu0 0.0
    %1686 = vmatprep.subr.mxu0 0.0
    %1687 = vmatpush1.msra.mxu0 0.0
    %1688 = vmatprep.subr.mxu0 0.0
    %1689 = vmatpush1.msra.mxu0 0.0
    %1690 = vmatprep.subr.mxu0 0.0
    %1691 = vmatpush1.msra.mxu0 0.0
    %1692 = vmatprep.subr.mxu0 0.0
    %1693 = vmatpush1.msra.mxu0 0.0
    %1694 = vmatprep.subr.mxu0 0.0
    %1695 = vmatpush1.msra.mxu0 0.0
    %1696 = vmatprep.subr.mxu0 0.0
    %1697 = vmatpush1.msra.mxu0 0.0
    %1698 = vmatprep.subr.mxu0 0.0
    %1699 = vmatpush1.msra.mxu0 0.0
    %1700 = vmatprep.subr.mxu0 0.0
    %1701 = vmatpush1.msra.mxu0 0.0
    %1702 = vmatprep.subr.mxu0 0.0
    %1703 = vmatpush1.msra.mxu0 0.0
    %1704 = vmatprep.subr.mxu0 0.0
    %1705 = vmatpush1.msra.mxu0 0.0
    %1706 = vmatprep.subr.mxu0 0.0
    %1707 = vmatpush1.msra.mxu0 0.0
    %1708 = vmatprep.subr.mxu0 0.0
    %1709 = vmatpush1.msra.mxu0 0.0
    %1710 = vmatprep.subr.mxu0 0.0
    %1711 = vmatpush1.msra.mxu0 0.0
    %1712 = vmatprep.mubr.f32.mxu0 0.0
    %v1713 = vand.u32 %v1232, 4294901760
    %1714 = vmatmul.mubr.f32.gmra.mrb[0].mxu0 %v1713
    %v1715 = vpop.f32.mrb[0].mxu0
    %v1716 = vadd.f32 %v1638, %v1715
    %v1717 = vpop.f32.mrb[0].mxu0
    %1718 = vmatprep.mubr.f32.mxu0 0.0
    %v1719 = vand.u32 %v1234, 4294901760
    %1720 = vmatmul.mubr.f32.gmra.mrb[0].mxu0 %v1719
    %v1721 = vpop.f32.mrb[0].mxu0
    %v1722 = vadd.f32 %v1644, %v1721
    %v1723 = vpop.f32.mrb[0].mxu0
    %1724 = vdwg.mxu0
    %1725 = vst.msk [vmem:[#allocation7] sm:$0xff] %vm51, %v1716
    %1726 = vst.msk [vmem:[#allocation7 + $0x8] sm:$0xff] %vm51, %v1722
    %v1727 = vsel %vm51, %v1037, 0.0
    %1728 = vadd.xlane.f32.xlu0 %v1727
    %v1729 = vpop.xlane.xlu0 %1728
    %v1730 = vsel %vm51, %v1038, 0.0
    %1731 = vadd.xlane.f32.xlu0 %v1730
    %v1732 = vpop.xlane.xlu0 %1731
    %v1733 = vsel %vm51, %v1039, 0.0
    %1734 = vadd.xlane.f32.xlu0 %v1733
    %v1735 = vpop.xlane.xlu0 %1734
    %v1736 = vsel %vm51, %v1040, 0.0
    %1737 = vadd.xlane.f32.xlu0 %v1736
    %v1738 = vpop.xlane.xlu0 %1737
    %v1739 = vsel %vm51, %v1041, 0.0
    %1740 = vadd.xlane.f32.xlu0 %v1739
    %v1741 = vpop.xlane.xlu0 %1740
    %v1742 = vsel %vm51, %v1042, 0.0
    %1743 = vadd.xlane.f32.xlu0 %v1742
    %v1744 = vpop.xlane.xlu0 %1743
    %v1745 = vsel %vm51, %v1043, 0.0
    %1746 = vadd.xlane.f32.xlu0 %v1745
    %v1747 = vpop.xlane.xlu0 %1746
    %v1748 = vsel %vm51, %v1044, 0.0
    %1749 = vadd.xlane.f32.xlu0 %v1748
    %v1750 = vpop.xlane.xlu0 %1749
    %v1751 = vsel %vm51, %v1045, 0.0
    %1752 = vadd.xlane.f32.xlu0 %v1751
    %v1753 = vpop.xlane.xlu0 %1752
    %v1754 = vsel %vm51, %v1046, 0.0
    %1755 = vadd.xlane.f32.xlu0 %v1754
    %v1756 = vpop.xlane.xlu0 %1755
    %v1757 = vsel %vm51, %v1047, 0.0
    %1758 = vadd.xlane.f32.xlu0 %v1757
    %v1759 = vpop.xlane.xlu0 %1758
    %v1760 = vsel %vm51, %v1048, 0.0
    %1761 = vadd.xlane.f32.xlu0 %v1760
    %v1762 = vpop.xlane.xlu0 %1761
    %v1763 = vsel %vm51, %v1049, 0.0
    %1764 = vadd.xlane.f32.xlu0 %v1763
    %v1765 = vpop.xlane.xlu0 %1764
    %v1766 = vsel %vm51, %v1050, 0.0
    %1767 = vadd.xlane.f32.xlu0 %v1766
    %v1768 = vpop.xlane.xlu0 %1767
    %v1769 = vsel %vm51, %v1051, 0.0
    %1770 = vadd.xlane.f32.xlu0 %v1769
    %v1771 = vpop.xlane.xlu0 %1770
    %v1772 = vsel %vm51, %v1052, 0.0
    %1773 = vadd.xlane.f32.xlu0 %v1772
    %v1774 = vpop.xlane.xlu0 %1773
    %v1775 = vrcp.pop 8.0
    %v1776 = vmul.f32 %v1729, %v1775
    %v1777 = vmul.f32 %v1732, %v1775
    %v1778 = vmul.f32 %v1735, %v1775
    %v1779 = vmul.f32 %v1738, %v1775
    %v1780 = vmul.f32 %v1741, %v1775
    %v1781 = vmul.f32 %v1744, %v1775
    %v1782 = vmul.f32 %v1747, %v1775
    %v1783 = vmul.f32 %v1750, %v1775
    %v1784 = vmul.f32 %v1753, %v1775
    %v1785 = vmul.f32 %v1756, %v1775
    %v1786 = vmul.f32 %v1759, %v1775
    %v1787 = vmul.f32 %v1762, %v1775
    %v1788 = vmul.f32 %v1765, %v1775
    %v1789 = vmul.f32 %v1768, %v1775
    %v1790 = vmul.f32 %v1771, %v1775
    %v1791 = vmul.f32 %v1774, %v1775
    %v1808 = vlaneseq
    %v1809 = vand.u32 %v1808, 127
    %v1810 = vlaneseq
    %v1811 = vshrl.u32 %v1810, 7
    %v1812 = vsub.s32 %v1809, %v1811
    %v1813 = vrot.slane %v1776, %v1812
    %v1814 = vlaneseq
    %v1815 = vshrl.u32 %v1814, 7
    %v1816 = vsub.s32 %v1809, %v1815
    %v1817 = vrot.slane %v1777, %v1816
    %v1818 = vlaneseq
    %v1819 = vshrl.u32 %v1818, 7
    %v1820 = vsub.s32 %v1809, %v1819
    %v1821 = vrot.slane %v1778, %v1820
    %v1822 = vlaneseq
    %v1823 = vshrl.u32 %v1822, 7
    %v1824 = vsub.s32 %v1809, %v1823
    %v1825 = vrot.slane %v1779, %v1824
    %v1826 = vlaneseq
    %v1827 = vshrl.u32 %v1826, 7
    %v1828 = vsub.s32 %v1809, %v1827
    %v1829 = vrot.slane %v1780, %v1828
    %v1830 = vlaneseq
    %v1831 = vshrl.u32 %v1830, 7
    %v1832 = vsub.s32 %v1809, %v1831
    %v1833 = vrot.slane %v1781, %v1832
    %v1834 = vlaneseq
    %v1835 = vshrl.u32 %v1834, 7
    %v1836 = vsub.s32 %v1809, %v1835
    %v1837 = vrot.slane %v1782, %v1836
    %v1838 = vlaneseq
    %v1839 = vshrl.u32 %v1838, 7
    %v1840 = vsub.s32 %v1809, %v1839
    %v1841 = vrot.slane %v1783, %v1840
    %v1842 = vlaneseq
    %v1843 = vshrl.u32 %v1842, 7
    %v1844 = vsub.s32 %v1809, %v1843
    %v1845 = vrot.slane %v1784, %v1844
    %v1846 = vlaneseq
    %v1847 = vshrl.u32 %v1846, 7
    %v1848 = vsub.s32 %v1809, %v1847
    %v1849 = vrot.slane %v1785, %v1848
    %v1850 = vlaneseq
    %v1851 = vshrl.u32 %v1850, 7
    %v1852 = vsub.s32 %v1809, %v1851
    %v1853 = vrot.slane %v1786, %v1852
    %v1854 = vlaneseq
    %v1855 = vshrl.u32 %v1854, 7
    %v1856 = vsub.s32 %v1809, %v1855
    %v1857 = vrot.slane %v1787, %v1856
    %v1858 = vlaneseq
    %v1859 = vshrl.u32 %v1858, 7
    %v1860 = vsub.s32 %v1809, %v1859
    %v1861 = vrot.slane %v1788, %v1860
    %v1862 = vlaneseq
    %v1863 = vshrl.u32 %v1862, 7
    %v1864 = vsub.s32 %v1809, %v1863
    %v1865 = vrot.slane %v1789, %v1864
    %v1866 = vlaneseq
    %v1867 = vshrl.u32 %v1866, 7
    %v1868 = vsub.s32 %v1809, %v1867
    %v1869 = vrot.slane %v1790, %v1868
    %v1870 = vlaneseq
    %v1871 = vshrl.u32 %v1870, 7
    %v1872 = vsub.s32 %v1809, %v1871
    %v1873 = vrot.slane %v1791, %v1872
    %v1874 = vsel %vm1203, %v1817, %v1813
    %v1875 = vsel %vm1205, %v1821, %v1874
    %v1876 = vsel %vm1207, %v1825, %v1875
    %v1877 = vsel %vm1209, %v1829, %v1876
    %v1878 = vsel %vm1211, %v1833, %v1877
    %v1879 = vsel %vm1213, %v1837, %v1878
    %v1880 = vsel %vm1215, %v1841, %v1879
    %v1881 = vsel %vm1203, %v1849, %v1845
    %v1882 = vsel %vm1205, %v1853, %v1881
    %v1883 = vsel %vm1207, %v1857, %v1882
    %v1884 = vsel %vm1209, %v1861, %v1883
    %v1885 = vsel %vm1211, %v1865, %v1884
    %v1886 = vsel %vm1213, %v1869, %v1885
    %v1887 = vsel %vm1215, %v1873, %v1886
    %1890 = vst.msk [vmem:[#allocation8] sm:$0xff] %vm51, %v1880
    %1891 = vst.msk [vmem:[#allocation8 + $0x8] sm:$0xff] %vm51, %v1887
    // Predicated region
    $region18: #{agi_explainability_forward.1} parent=1 // pred_check
      _
    $region19: #{agi_explainability_forward.1} parent=1 // pred_check_branch
      %1893 = sbr.rel (0) target = $region21
    $region20: #{agi_explainability_forward.1} parent=1 // pred_region
      %s1895 = ssub.s32 256, 256
      %1896 = vsyncadd [#allocation4], %s1895
      %s1897 = sshll.u32 [#allocation7], 4
      %s1898 = int_to_ptr.vmem [resolvable:$true] %s1897
      %1903 = dma.vmem_to_hbm [thread:$0]  %s1898, 256, %s2, [#allocation4], 128, 128, 8
    $region21: #{agi_explainability_forward.1} parent=1 // pred_fallthru
      _
    // Predicated region
    $region22: #{agi_explainability_forward.1} parent=1 // pred_check
      _
    $region23: #{agi_explainability_forward.1} parent=1 // pred_check_branch
      %1905 = sbr.rel (0) target = $region25
    $region24: #{agi_explainability_forward.1} parent=1 // pred_region
      %s1907 = ssub.s32 256, 256
      %1908 = vsyncadd [#allocation9], %s1907
      %s1909 = sshll.u32 [#allocation8], 4
      %s1910 = int_to_ptr.vmem [resolvable:$true] %s1909
      %1915 = dma.vmem_to_hbm [thread:$0]  %s1910, 256, %s3, [#allocation9], 128, 128, 8
    $region25: #{agi_explainability_forward.1} parent=1 // pred_fallthru
      _
    // Predicated region
    $region26: #{agi_explainability_forward.1} parent=1 // pred_check
      _
    $region27: #{agi_explainability_forward.1} parent=1 // pred_check_branch
      %1917 = sbr.rel (0) target = $region29
    $region28: #{agi_explainability_forward.1} parent=1 // pred_region
      %1918 = dma.done [#allocation4], 256
    $region29: #{agi_explainability_forward.1} parent=1 // pred_fallthru
      _
    // Predicated region
    $region30: #{agi_explainability_forward.1} parent=1 // pred_check
      _
    $region31: #{agi_explainability_forward.1} parent=1 // pred_check_branch
      %1920 = sbr.rel (0) target = $region33
    $region32: #{agi_explainability_forward.1} parent=1 // pred_region
      %1921 = dma.done [#allocation9], 256
    $region33: #{agi_explainability_forward.1} parent=1 // pred_fallthru
      _
    %1922 = vsyncpa [#allocation3], 1
    %1923 = vsyncpa [#allocation6], 1
    %1924 = vsyncpa [#allocation4], 1
    %1925 = vsyncpa [#allocation9], 1

</llo_original>
